<compile_context>
chip_gen: v5e
topology: v5e:2x2
jax: 0.10.0
libtpu: 0.0.40
codegen_flags: <defaults>
</compile_context>

<pallas_src>
import functools

import jax
import jax.numpy as jnp
from jax.experimental import pallas as pl
from jax.experimental.pallas import tpu as pltpu

LANE = 128


def _round_up(x, m):
    return ((x + m - 1) // m) * m


def ae_kernel(x_ref,
              w1, b1, w2, b2, w3, b3, w4, b4,
              w5, b5, w6, b6, w7, b7, w8, b8,
              xbar_ref, z_ref,
              *, compute_dtype):
    """Fused AE forward pass for one batch tile."""

    def lin(h, w_ref, b_ref):
        # bf16 MXU operands, f32 accumulation, f32 bias add.
        y = jnp.dot(h.astype(compute_dtype), w_ref[...],
                    preferred_element_type=jnp.float32)
        return y + b_ref[...]

    def lin_relu(h, w_ref, b_ref):
        return jnp.maximum(lin(h, w_ref, b_ref), 0.0)

    x = x_ref[...]

    # Encoder
    h1 = lin_relu(x, w1, b1)          # F.relu(enc_1(x))
    h2 = lin_relu(h1, w2, b2)         # F.relu(enc_2(h1))
    h3 = lin_relu(h2, w3, b3)         # F.relu(enc_3(h2))
    z = lin(h3, w4, b4)               # z_layer(h3), lane-padded, extra cols == 0

    # Decoder
    d1 = lin_relu(z, w5, b5)          # F.relu(dec_1(z)), w5 zero-padded input rows
    d2 = lin_relu(d1, w6, b6)         # F.relu(dec_2(d1))
    d3 = lin_relu(d2, w7, b7)         # F.relu(dec_3(d2))
    x_bar = lin(d3, w8, b8)           # x_bar_layer(d3), lane-padded

    z_ref[...] = z.astype(z_ref.dtype)
    xbar_ref[...] = x_bar.astype(xbar_ref.dtype)


def _prepare_params(params, z_pad, in_pad, compute_dtype):
    """Pad final-layer dims to 128 lanes and cast weights to the MXU dtype."""
    prepped = []
    for i, (w, b) in enumerate(params):
        w = jnp.asarray(w, jnp.float32)
        b = jnp.asarray(b, jnp.float32).reshape(1, -1)
        if i == 3:   # z_layer: pad output columns to z_pad
            w = jnp.pad(w, ((0, 0), (0, z_pad - w.shape[1])))
            b = jnp.pad(b, ((0, 0), (0, z_pad - b.shape[1])))
        if i == 4:   # dec_1: pad input rows to match padded z width
            w = jnp.pad(w, ((0, z_pad - w.shape[0]), (0, 0)))
        if i == 7:   # x_bar_layer: pad output columns to in_pad
            w = jnp.pad(w, ((0, 0), (0, in_pad - w.shape[1])))
            b = jnp.pad(b, ((0, 0), (0, in_pad - b.shape[1])))
        prepped.append((w.astype(compute_dtype), b))  # biases stay f32
    return prepped


def ae_forward(x, params, *, block_rows=128, compute_dtype=jnp.bfloat16):
    """params: list of 8 (W, b) pairs, W shape (in, out), b shape (1, out)."""
    x = jnp.asarray(x, jnp.float32)
    batch, n_input = x.shape
    n_z = params[3][0].shape[1]

    z_pad = _round_up(n_z, LANE)
    in_pad = _round_up(n_input, LANE)
    prepped = _prepare_params(params, z_pad, in_pad, compute_dtype)

    # Batch tiling: TB rows per grid step (multiple of 8; 128+ keeps MXU fed).
    tb = max(8, min(block_rows, _round_up(batch, 8)))
    b_pad = _round_up(batch, tb)
    if b_pad != batch:
        x = jnp.pad(x, ((0, b_pad - batch), (0, 0)))
    grid = (b_pad // tb,)

    flat_args = [x]
    in_specs = [pl.BlockSpec((tb, n_input), lambda i: (i, 0))]
    for w, b in prepped:
        flat_args += [w, b]
        # Constant index_map: weights/biases fetched once, resident in VMEM.
        in_specs += [pl.BlockSpec(w.shape, lambda i: (0, 0)),
                     pl.BlockSpec(b.shape, lambda i: (0, 0))]

    flops = int(2 * b_pad * sum(int(w.shape[0]) * int(w.shape[1]) for w, _ in prepped))
    bytes_accessed = int(
        x.size * 4
        + sum(int(w.size) * w.dtype.itemsize + int(b.size) * 4 for w, b in prepped)
        + b_pad * (in_pad + z_pad) * 4)

    xbar_p, z_p = pl.pallas_call(
        functools.partial(ae_kernel, compute_dtype=compute_dtype),
        out_shape=(
            jax.ShapeDtypeStruct((b_pad, in_pad), jnp.float32),  # x_bar (padded)
            jax.ShapeDtypeStruct((b_pad, z_pad), jnp.float32),   # z     (padded)
        ),
        grid=grid,
        in_specs=in_specs,
        out_specs=(
            pl.BlockSpec((tb, in_pad), lambda i: (i, 0)),
            pl.BlockSpec((tb, z_pad), lambda i: (i, 0)),
        ),
        compiler_params=pltpu.CompilerParams(
            dimension_semantics=("parallel",)),
        cost_estimate=pl.CostEstimate(
            flops=flops, transcendentals=0, bytes_accessed=bytes_accessed),
    )(*flat_args)

    # Strip batch + lane padding.
    return xbar_p[:batch, :n_input], z_p[:batch, :n_z]


def init_linear(key, n_in, n_out):
    """PyTorch-Linear-style init U(-1/sqrt(in), 1/sqrt(in)); W stored (in, out)."""
    kw, kb = jax.random.split(key)
    bound = 1.0 / jnp.sqrt(jnp.asarray(n_in, jnp.float32))
    w = jax.random.uniform(kw, (n_in, n_out), jnp.float32, -bound, bound)
    b = jax.random.uniform(kb, (1, n_out), jnp.float32, -bound, bound)
    return w, b


def ae_reference(x, params, compute_dtype=jnp.bfloat16):
    """Pure-JAX reference with the same bf16-operand / f32-accumulate recipe."""
    h = jnp.asarray(x, jnp.float32)
    z = None
    for i, (w, b) in enumerate(params):
        y = jnp.dot(h.astype(compute_dtype), jnp.asarray(w).astype(compute_dtype),
                    preferred_element_type=jnp.float32) + b.reshape(1, -1)
        if i not in (3, 7):      # z_layer (3) and x_bar_layer (7) have no relu
            y = jnp.maximum(y, 0.0)
        if i == 3:
            z = y
        h = y
    return h, z


if __name__ == "__main__":
    # Small, AE-consistent sizes; batch chosen so the grid has 2 tiles of 128.
    batch = 256
    n_input = 32
    n_enc_1, n_enc_2, n_enc_3 = 64, 64, 128
    n_z = 16
    n_dec_1, n_dec_2, n_dec_3 = 128, 64, 64

    dims = [
        (n_input, n_enc_1),   # enc_1
        (n_enc_1, n_enc_2),   # enc_2
        (n_enc_2, n_enc_3),   # enc_3
        (n_enc_3, n_z),       # z_layer
        (n_z, n_dec_1),       # dec_1
        (n_dec_1, n_dec_2),   # dec_2
        (n_dec_2, n_dec_3),   # dec_3
        (n_dec_3, n_input),   # x_bar_layer
    ]

    key = jax.random.PRNGKey(0)
    keys = jax.random.split(key, len(dims) + 1)
    params = [init_linear(keys[i], d_in, d_out) for i, (d_in, d_out) in enumerate(dims)]
    x = jax.random.normal(keys[-1], (batch, n_input), jnp.float32)

    x_bar, z = ae_forward(x, params, block_rows=128)
    x_bar, z = jax.block_until_ready((x_bar, z))

    # Correctness vs pure-JAX reference (same bf16 operands, f32 accumulation).
    x_bar_ref, z_ref = ae_reference(x, params)
    assert x_bar.shape == (batch, n_input) and z.shape == (batch, n_z)
    assert jnp.allclose(x_bar, x_bar_ref, atol=1e-2, rtol=1e-2)
    assert jnp.allclose(z, z_ref, atol=1e-2, rtol=1e-2)

    print("KERNEL_OK")
</pallas_src>

<mosaic_0001>
module attributes {stable_mosaic.version = 11 : i64} {
  func.func @ae_kernel(%arg0: i32, %arg1: memref<128x32xf32, #tpu.memory_space<vmem>>, %arg2: memref<32x64xbf16, #tpu.memory_space<vmem>>, %arg3: memref<1x64xf32, #tpu.memory_space<vmem>>, %arg4: memref<64x64xbf16, #tpu.memory_space<vmem>>, %arg5: memref<1x64xf32, #tpu.memory_space<vmem>>, %arg6: memref<64x128xbf16, #tpu.memory_space<vmem>>, %arg7: memref<1x128xf32, #tpu.memory_space<vmem>>, %arg8: memref<128x128xbf16, #tpu.memory_space<vmem>>, %arg9: memref<1x128xf32, #tpu.memory_space<vmem>>, %arg10: memref<128x128xbf16, #tpu.memory_space<vmem>>, %arg11: memref<1x128xf32, #tpu.memory_space<vmem>>, %arg12: memref<128x64xbf16, #tpu.memory_space<vmem>>, %arg13: memref<1x64xf32, #tpu.memory_space<vmem>>, %arg14: memref<64x64xbf16, #tpu.memory_space<vmem>>, %arg15: memref<1x64xf32, #tpu.memory_space<vmem>>, %arg16: memref<64x128xbf16, #tpu.memory_space<vmem>>, %arg17: memref<1x128xf32, #tpu.memory_space<vmem>>, %arg18: memref<128x128xf32, #tpu.memory_space<vmem>>, %arg19: memref<128x128xf32, #tpu.memory_space<vmem>>) attributes {dimension_semantics = [#tpu.dimension_semantics<parallel>], iteration_bounds = array<i64: 2>, scalar_prefetch = 0 : i64, scratch_operands = 0 : i64, tpu.core_type = #tpu.core_type<tc>, window_params = [{transform_indices = @transform_0, window_bounds = array<i64: 128, 32>}, {pipeline_mode = #tpu.pipeline_mode<synchronous>, transform_indices = @transform_1, window_bounds = array<i64: 32, 64>}, {pipeline_mode = #tpu.pipeline_mode<synchronous>, transform_indices = @transform_2, window_bounds = array<i64: 1, 64>}, {pipeline_mode = #tpu.pipeline_mode<synchronous>, transform_indices = @transform_3, window_bounds = array<i64: 64, 64>}, {pipeline_mode = #tpu.pipeline_mode<synchronous>, transform_indices = @transform_4, window_bounds = array<i64: 1, 64>}, {pipeline_mode = #tpu.pipeline_mode<synchronous>, transform_indices = @transform_5, window_bounds = array<i64: 64, 128>}, {pipeline_mode = #tpu.pipeline_mode<synchronous>, transform_indices = @transform_6, window_bounds = array<i64: 1, 128>}, {pipeline_mode = #tpu.pipeline_mode<synchronous>, transform_indices = @transform_7, window_bounds = array<i64: 128, 128>}, {pipeline_mode = #tpu.pipeline_mode<synchronous>, transform_indices = @transform_8, window_bounds = array<i64: 1, 128>}, {pipeline_mode = #tpu.pipeline_mode<synchronous>, transform_indices = @transform_9, window_bounds = array<i64: 128, 128>}, {pipeline_mode = #tpu.pipeline_mode<synchronous>, transform_indices = @transform_10, window_bounds = array<i64: 1, 128>}, {pipeline_mode = #tpu.pipeline_mode<synchronous>, transform_indices = @transform_11, window_bounds = array<i64: 128, 64>}, {pipeline_mode = #tpu.pipeline_mode<synchronous>, transform_indices = @transform_12, window_bounds = array<i64: 1, 64>}, {pipeline_mode = #tpu.pipeline_mode<synchronous>, transform_indices = @transform_13, window_bounds = array<i64: 64, 64>}, {pipeline_mode = #tpu.pipeline_mode<synchronous>, transform_indices = @transform_14, window_bounds = array<i64: 1, 64>}, {pipeline_mode = #tpu.pipeline_mode<synchronous>, transform_indices = @transform_15, window_bounds = array<i64: 64, 128>}, {pipeline_mode = #tpu.pipeline_mode<synchronous>, transform_indices = @transform_16, window_bounds = array<i64: 1, 128>}, {transform_indices = @transform_17, window_bounds = array<i64: 128, 128>}, {transform_indices = @transform_18, window_bounds = array<i64: 128, 128>}]} {
    %c0 = arith.constant 0 : index
    %c0_0 = arith.constant 0 : index
    %0 = vector.load %arg1[%c0, %c0_0] : memref<128x32xf32, #tpu.memory_space<vmem>>, vector<128x32xf32>
    %1 = arith.truncf %0 : vector<128x32xf32> to vector<128x32xbf16>
    %c0_1 = arith.constant 0 : index
    %c0_2 = arith.constant 0 : index
    %2 = vector.load %arg2[%c0_1, %c0_2] : memref<32x64xbf16, #tpu.memory_space<vmem>>, vector<32x64xbf16>
    %cst = arith.constant dense<0.000000e+00> : vector<128x64xf32>
    %3 = tpu.matmul %1, %2, %cst {dimension_numbers = #tpu.dot_dimension_numbers<[1], [0], [0], [1], [0, 0, 1, 1], [], []>} : vector<128x32xbf16>, vector<32x64xbf16>, vector<128x64xf32> -> vector<128x64xf32>
    %c0_3 = arith.constant 0 : index
    %c0_4 = arith.constant 0 : index
    %4 = vector.load %arg3[%c0_3, %c0_4] : memref<1x64xf32, #tpu.memory_space<vmem>>, vector<1x64xf32>
    %5 = vector.broadcast %4 : vector<1x64xf32> to vector<128x64xf32>
    %6 = arith.addf %3, %5 : vector<128x64xf32>
    %cst_5 = arith.constant 0.000000e+00 : f32
    %7 = vector.broadcast %cst_5 : f32 to vector<128x64xf32>
    %8 = arith.maximumf %6, %7 : vector<128x64xf32>
    %9 = arith.truncf %8 : vector<128x64xf32> to vector<128x64xbf16>
    %c0_6 = arith.constant 0 : index
    %c0_7 = arith.constant 0 : index
    %10 = vector.load %arg4[%c0_6, %c0_7] : memref<64x64xbf16, #tpu.memory_space<vmem>>, vector<64x64xbf16>
    %cst_8 = arith.constant dense<0.000000e+00> : vector<128x64xf32>
    %11 = tpu.matmul %9, %10, %cst_8 {dimension_numbers = #tpu.dot_dimension_numbers<[1], [0], [0], [1], [0, 0, 1, 1], [], []>} : vector<128x64xbf16>, vector<64x64xbf16>, vector<128x64xf32> -> vector<128x64xf32>
    %c0_9 = arith.constant 0 : index
    %c0_10 = arith.constant 0 : index
    %12 = vector.load %arg5[%c0_9, %c0_10] : memref<1x64xf32, #tpu.memory_space<vmem>>, vector<1x64xf32>
    %13 = vector.broadcast %12 : vector<1x64xf32> to vector<128x64xf32>
    %14 = arith.addf %11, %13 : vector<128x64xf32>
    %cst_11 = arith.constant 0.000000e+00 : f32
    %15 = vector.broadcast %cst_11 : f32 to vector<128x64xf32>
    %16 = arith.maximumf %14, %15 : vector<128x64xf32>
    %17 = arith.truncf %16 : vector<128x64xf32> to vector<128x64xbf16>
    %c0_12 = arith.constant 0 : index
    %c0_13 = arith.constant 0 : index
    %18 = vector.load %arg6[%c0_12, %c0_13] : memref<64x128xbf16, #tpu.memory_space<vmem>>, vector<64x128xbf16>
    %cst_14 = arith.constant dense<0.000000e+00> : vector<128x128xf32>
    %19 = tpu.matmul %17, %18, %cst_14 {dimension_numbers = #tpu.dot_dimension_numbers<[1], [0], [0], [1], [0, 0, 1, 1], [], []>} : vector<128x64xbf16>, vector<64x128xbf16>, vector<128x128xf32> -> vector<128x128xf32>
    %c0_15 = arith.constant 0 : index
    %c0_16 = arith.constant 0 : index
    %20 = vector.load %arg7[%c0_15, %c0_16] : memref<1x128xf32, #tpu.memory_space<vmem>>, vector<1x128xf32>
    %21 = vector.broadcast %20 : vector<1x128xf32> to vector<128x128xf32>
    %22 = arith.addf %19, %21 : vector<128x128xf32>
    %cst_17 = arith.constant 0.000000e+00 : f32
    %23 = vector.broadcast %cst_17 : f32 to vector<128x128xf32>
    %24 = arith.maximumf %22, %23 : vector<128x128xf32>
    %25 = arith.truncf %24 : vector<128x128xf32> to vector<128x128xbf16>
    %c0_18 = arith.constant 0 : index
    %c0_19 = arith.constant 0 : index
    %26 = vector.load %arg8[%c0_18, %c0_19] : memref<128x128xbf16, #tpu.memory_space<vmem>>, vector<128x128xbf16>
    %cst_20 = arith.constant dense<0.000000e+00> : vector<128x128xf32>
    %27 = tpu.matmul %25, %26, %cst_20 {dimension_numbers = #tpu.dot_dimension_numbers<[1], [0], [0], [1], [0, 0, 1, 1], [], []>} : vector<128x128xbf16>, vector<128x128xbf16>, vector<128x128xf32> -> vector<128x128xf32>
    %c0_21 = arith.constant 0 : index
    %c0_22 = arith.constant 0 : index
    %28 = vector.load %arg9[%c0_21, %c0_22] : memref<1x128xf32, #tpu.memory_space<vmem>>, vector<1x128xf32>
    %29 = vector.broadcast %28 : vector<1x128xf32> to vector<128x128xf32>
    %30 = arith.addf %27, %29 : vector<128x128xf32>
    %31 = arith.truncf %30 : vector<128x128xf32> to vector<128x128xbf16>
    %c0_23 = arith.constant 0 : index
    %c0_24 = arith.constant 0 : index
    %32 = vector.load %arg10[%c0_23, %c0_24] : memref<128x128xbf16, #tpu.memory_space<vmem>>, vector<128x128xbf16>
    %cst_25 = arith.constant dense<0.000000e+00> : vector<128x128xf32>
    %33 = tpu.matmul %31, %32, %cst_25 {dimension_numbers = #tpu.dot_dimension_numbers<[1], [0], [0], [1], [0, 0, 1, 1], [], []>} : vector<128x128xbf16>, vector<128x128xbf16>, vector<128x128xf32> -> vector<128x128xf32>
    %c0_26 = arith.constant 0 : index
    %c0_27 = arith.constant 0 : index
    %34 = vector.load %arg11[%c0_26, %c0_27] : memref<1x128xf32, #tpu.memory_space<vmem>>, vector<1x128xf32>
    %35 = vector.broadcast %34 : vector<1x128xf32> to vector<128x128xf32>
    %36 = arith.addf %33, %35 : vector<128x128xf32>
    %cst_28 = arith.constant 0.000000e+00 : f32
    %37 = vector.broadcast %cst_28 : f32 to vector<128x128xf32>
    %38 = arith.maximumf %36, %37 : vector<128x128xf32>
    %39 = arith.truncf %38 : vector<128x128xf32> to vector<128x128xbf16>
    %c0_29 = arith.constant 0 : index
    %c0_30 = arith.constant 0 : index
    %40 = vector.load %arg12[%c0_29, %c0_30] : memref<128x64xbf16, #tpu.memory_space<vmem>>, vector<128x64xbf16>
    %cst_31 = arith.constant dense<0.000000e+00> : vector<128x64xf32>
    %41 = tpu.matmul %39, %40, %cst_31 {dimension_numbers = #tpu.dot_dimension_numbers<[1], [0], [0], [1], [0, 0, 1, 1], [], []>} : vector<128x128xbf16>, vector<128x64xbf16>, vector<128x64xf32> -> vector<128x64xf32>
    %c0_32 = arith.constant 0 : index
    %c0_33 = arith.constant 0 : index
    %42 = vector.load %arg13[%c0_32, %c0_33] : memref<1x64xf32, #tpu.memory_space<vmem>>, vector<1x64xf32>
    %43 = vector.broadcast %42 : vector<1x64xf32> to vector<128x64xf32>
    %44 = arith.addf %41, %43 : vector<128x64xf32>
    %cst_34 = arith.constant 0.000000e+00 : f32
    %45 = vector.broadcast %cst_34 : f32 to vector<128x64xf32>
    %46 = arith.maximumf %44, %45 : vector<128x64xf32>
    %47 = arith.truncf %46 : vector<128x64xf32> to vector<128x64xbf16>
    %c0_35 = arith.constant 0 : index
    %c0_36 = arith.constant 0 : index
    %48 = vector.load %arg14[%c0_35, %c0_36] : memref<64x64xbf16, #tpu.memory_space<vmem>>, vector<64x64xbf16>
    %cst_37 = arith.constant dense<0.000000e+00> : vector<128x64xf32>
    %49 = tpu.matmul %47, %48, %cst_37 {dimension_numbers = #tpu.dot_dimension_numbers<[1], [0], [0], [1], [0, 0, 1, 1], [], []>} : vector<128x64xbf16>, vector<64x64xbf16>, vector<128x64xf32> -> vector<128x64xf32>
    %c0_38 = arith.constant 0 : index
    %c0_39 = arith.constant 0 : index
    %50 = vector.load %arg15[%c0_38, %c0_39] : memref<1x64xf32, #tpu.memory_space<vmem>>, vector<1x64xf32>
    %51 = vector.broadcast %50 : vector<1x64xf32> to vector<128x64xf32>
    %52 = arith.addf %49, %51 : vector<128x64xf32>
    %cst_40 = arith.constant 0.000000e+00 : f32
    %53 = vector.broadcast %cst_40 : f32 to vector<128x64xf32>
    %54 = arith.maximumf %52, %53 : vector<128x64xf32>
    %55 = arith.truncf %54 : vector<128x64xf32> to vector<128x64xbf16>
    %c0_41 = arith.constant 0 : index
    %c0_42 = arith.constant 0 : index
    %56 = vector.load %arg16[%c0_41, %c0_42] : memref<64x128xbf16, #tpu.memory_space<vmem>>, vector<64x128xbf16>
    %cst_43 = arith.constant dense<0.000000e+00> : vector<128x128xf32>
    %57 = tpu.matmul %55, %56, %cst_43 {dimension_numbers = #tpu.dot_dimension_numbers<[1], [0], [0], [1], [0, 0, 1, 1], [], []>} : vector<128x64xbf16>, vector<64x128xbf16>, vector<128x128xf32> -> vector<128x128xf32>
    %c0_44 = arith.constant 0 : index
    %c0_45 = arith.constant 0 : index
    %58 = vector.load %arg17[%c0_44, %c0_45] : memref<1x128xf32, #tpu.memory_space<vmem>>, vector<1x128xf32>
    %59 = vector.broadcast %58 : vector<1x128xf32> to vector<128x128xf32>
    %60 = arith.addf %57, %59 : vector<128x128xf32>
    %c0_46 = arith.constant 0 : index
    %c0_47 = arith.constant 0 : index
    %61 = vector.load %arg19[%c0_46, %c0_47] : memref<128x128xf32, #tpu.memory_space<vmem>>, vector<128x128xf32>
    tpu.vector_store %arg19[%c0_46, %c0_47], %30 {strides = array<i32>} : memref<128x128xf32, #tpu.memory_space<vmem>>, vector<128x128xf32>,
    %c0_48 = arith.constant 0 : index
    %c0_49 = arith.constant 0 : index
    %62 = vector.load %arg18[%c0_48, %c0_49] : memref<128x128xf32, #tpu.memory_space<vmem>>, vector<128x128xf32>
    tpu.vector_store %arg18[%c0_48, %c0_49], %60 {strides = array<i32>} : memref<128x128xf32, #tpu.memory_space<vmem>>, vector<128x128xf32>,
    return
  }
  func.func @transform_0(%arg0: i32) -> (i32, i32) {
    %c0_i32 = arith.constant 0 : i32
    %c0_i32_0 = arith.constant 0 : i32
    return %arg0, %c0_i32 : i32, i32
  }
  func.func @transform_1(%arg0: i32) -> (i32, i32) {
    %c0_i32 = arith.constant 0 : i32
    %c0_i32_0 = arith.constant 0 : i32
    %c0_i32_1 = arith.constant 0 : i32
    return %c0_i32, %c0_i32_0 : i32, i32
  }
  func.func @transform_2(%arg0: i32) -> (i32, i32) {
    %c0_i32 = arith.constant 0 : i32
    %c0_i32_0 = arith.constant 0 : i32
    %c0_i32_1 = arith.constant 0 : i32
    return %c0_i32, %c0_i32_0 : i32, i32
  }
  func.func @transform_3(%arg0: i32) -> (i32, i32) {
    %c0_i32 = arith.constant 0 : i32
    %c0_i32_0 = arith.constant 0 : i32
    %c0_i32_1 = arith.constant 0 : i32
    return %c0_i32, %c0_i32_0 : i32, i32
  }
  func.func @transform_4(%arg0: i32) -> (i32, i32) {
    %c0_i32 = arith.constant 0 : i32
    %c0_i32_0 = arith.constant 0 : i32
    %c0_i32_1 = arith.constant 0 : i32
    return %c0_i32, %c0_i32_0 : i32, i32
  }
  func.func @transform_5(%arg0: i32) -> (i32, i32) {
    %c0_i32 = arith.constant 0 : i32
    %c0_i32_0 = arith.constant 0 : i32
    %c0_i32_1 = arith.constant 0 : i32
    return %c0_i32, %c0_i32_0 : i32, i32
  }
  func.func @transform_6(%arg0: i32) -> (i32, i32) {
    %c0_i32 = arith.constant 0 : i32
    %c0_i32_0 = arith.constant 0 : i32
    %c0_i32_1 = arith.constant 0 : i32
    return %c0_i32, %c0_i32_0 : i32, i32
  }
  func.func @transform_7(%arg0: i32) -> (i32, i32) {
    %c0_i32 = arith.constant 0 : i32
    %c0_i32_0 = arith.constant 0 : i32
    %c0_i32_1 = arith.constant 0 : i32
    return %c0_i32, %c0_i32_0 : i32, i32
  }
  func.func @transform_8(%arg0: i32) -> (i32, i32) {
    %c0_i32 = arith.constant 0 : i32
    %c0_i32_0 = arith.constant 0 : i32
    %c0_i32_1 = arith.constant 0 : i32
    return %c0_i32, %c0_i32_0 : i32, i32
  }
  func.func @transform_9(%arg0: i32) -> (i32, i32) {
    %c0_i32 = arith.constant 0 : i32
    %c0_i32_0 = arith.constant 0 : i32
    %c0_i32_1 = arith.constant 0 : i32
    return %c0_i32, %c0_i32_0 : i32, i32
  }
  func.func @transform_10(%arg0: i32) -> (i32, i32) {
    %c0_i32 = arith.constant 0 : i32
    %c0_i32_0 = arith.constant 0 : i32
    %c0_i32_1 = arith.constant 0 : i32
    return %c0_i32, %c0_i32_0 : i32, i32
  }
  func.func @transform_11(%arg0: i32) -> (i32, i32) {
    %c0_i32 = arith.constant 0 : i32
    %c0_i32_0 = arith.constant 0 : i32
    %c0_i32_1 = arith.constant 0 : i32
    return %c0_i32, %c0_i32_0 : i32, i32
  }
  func.func @transform_12(%arg0: i32) -> (i32, i32) {
    %c0_i32 = arith.constant 0 : i32
    %c0_i32_0 = arith.constant 0 : i32
    %c0_i32_1 = arith.constant 0 : i32
    return %c0_i32, %c0_i32_0 : i32, i32
  }
  func.func @transform_13(%arg0: i32) -> (i32, i32) {
    %c0_i32 = arith.constant 0 : i32
    %c0_i32_0 = arith.constant 0 : i32
    %c0_i32_1 = arith.constant 0 : i32
    return %c0_i32, %c0_i32_0 : i32, i32
  }
  func.func @transform_14(%arg0: i32) -> (i32, i32) {
    %c0_i32 = arith.constant 0 : i32
    %c0_i32_0 = arith.constant 0 : i32
    %c0_i32_1 = arith.constant 0 : i32
    return %c0_i32, %c0_i32_0 : i32, i32
  }
  func.func @transform_15(%arg0: i32) -> (i32, i32) {
    %c0_i32 = arith.constant 0 : i32
    %c0_i32_0 = arith.constant 0 : i32
    %c0_i32_1 = arith.constant 0 : i32
    return %c0_i32, %c0_i32_0 : i32, i32
  }
  func.func @transform_16(%arg0: i32) -> (i32, i32) {
    %c0_i32 = arith.constant 0 : i32
    %c0_i32_0 = arith.constant 0 : i32
    %c0_i32_1 = arith.constant 0 : i32
    return %c0_i32, %c0_i32_0 : i32, i32
  }
  func.func @transform_17(%arg0: i32) -> (i32, i32) {
    %c0_i32 = arith.constant 0 : i32
    %c0_i32_0 = arith.constant 0 : i32
    return %arg0, %c0_i32 : i32, i32
  }
  func.func @transform_18(%arg0: i32) -> (i32, i32) {
    %c0_i32 = arith.constant 0 : i32
    %c0_i32_0 = arith.constant 0 : i32
    return %arg0, %c0_i32 : i32, i32
  }
}

</mosaic_0001>

<llo_original>
// kernel: tpu_custom_call.1
$region0: #{tpu_custom_call.1}
  #allocation0 [shape = 'u32[]', space=smem, size = 0x4, offset = 0x4, fixed_abs, tag = 'smem constant byte address 0x4 - core index']
  #allocation1 [shape = 'u32[72,128]{1,0:T(1,128)}', space=vmem, size = 0x9000, scoped, tag = 'internal scratch']
  %s0 = inlined_call_operand.vmem [shape: f32[256,32], index: 0, kind: input, shape index: {}]
  %s1 = inlined_call_operand.vmem [shape: bf16[32,64], index: 1, kind: input, shape index: {}]
  %s2 = inlined_call_operand.vmem [shape: f32[1,64], index: 2, kind: input, shape index: {}]
  %s3 = inlined_call_operand.vmem [shape: bf16[64,64], index: 3, kind: input, shape index: {}]
  %s4 = inlined_call_operand.vmem [shape: f32[1,64], index: 4, kind: input, shape index: {}]
  %s5 = inlined_call_operand.vmem [shape: bf16[64,128], index: 5, kind: input, shape index: {}]
  %s6 = inlined_call_operand.vmem [shape: f32[1,128], index: 6, kind: input, shape index: {}]
  %s7 = inlined_call_operand.vmem [shape: bf16[128,128], index: 7, kind: input, shape index: {}]
  %s8 = inlined_call_operand.vmem [shape: f32[1,128], index: 8, kind: input, shape index: {}]
  %s9 = inlined_call_operand.vmem [shape: bf16[128,128], index: 9, kind: input, shape index: {}]
  %s10 = inlined_call_operand.vmem [shape: f32[1,128], index: 10, kind: input, shape index: {}]
  %s11 = inlined_call_operand.vmem [shape: bf16[128,64], index: 11, kind: input, shape index: {}]
  %s12 = inlined_call_operand.vmem [shape: f32[1,64], index: 12, kind: input, shape index: {}]
  %s13 = inlined_call_operand.vmem [shape: bf16[64,64], index: 13, kind: input, shape index: {}]
  %s14 = inlined_call_operand.vmem [shape: f32[1,64], index: 14, kind: input, shape index: {}]
  %s15 = inlined_call_operand.vmem [shape: bf16[64,128], index: 15, kind: input, shape index: {}]
  %s16 = inlined_call_operand.vmem [shape: f32[1,128], index: 16, kind: input, shape index: {}]
  %s17 = inlined_call_operand.hbm [shape: f32[256,128], index: 17, kind: output, shape index: {0}]
  %s18 = inlined_call_operand.hbm [shape: f32[256,128], index: 18, kind: output, shape index: {1}]
  %19 = xla_tuple %s17, %s18
  %s20 = sld [smem:[#allocation0]]
  $region109: #{tpu_custom_call.1} parent=0
    _
  %s22 = ssub.s32 1, %s20
  %s23 = scalar_select 0, %s22, %s20
  $region1: #{tpu_custom_call.1} parent=0
    #allocation2 [shape = 'u8[131072]{0}', space=vmem, size = 0x20000, scoped, tag = 'output window, operand 0']
    #allocation3 [shape = 's32[2]{0}', space=sflag, size = 0x8, scoped, tag = 'scoped memory for tpu_custom_call.1']
    #allocation4 [shape = 'u8[131072]{0}', space=vmem, size = 0x20000, scoped, tag = 'output window, operand 1']
    #allocation5 [shape = 's32[2]{0}', space=sflag, size = 0x8, scoped, tag = 'scoped memory for tpu_custom_call.1']
    %24 = vsyncpa [#allocation3], 0
    %s25 = scalar_lea.sflag [#allocation3], 1
    %26 = vsyncpa %s25, 0
    %27 = vsyncpa [#allocation5], 0
    %s28 = scalar_lea.sflag [#allocation5], 1
    %29 = vsyncpa %s28, 0
    loop: start=0, step=1, limit=4
    $region2: #{tpu_custom_call.1} parent=1 // loop_pre_header
      _
    $region3: #{tpu_custom_call.1} parent=1 // loop_header
      %s31 = sphi 0, %s35
      %p32 = scmp.ge.s32.totalorder %s31, 4
      %s41 = sphi 0, %s43
      %s44 = sphi 0, %s41
      %s45 = sphi 0, %s44
      %s61 = sphi 0, %s45
      %s65 = sphi 0, %s65
      %s67 = sphi 0, %s65
      %s68 = sphi 0, %s67
      %s82 = sphi 0, %s68
      %s86 = sphi 0, %s86
      %s88 = sphi 0, %s86
      %s89 = sphi 0, %s88
      %s103 = sphi 0, %s89
      %s107 = sphi 0, %s107
      %s109 = sphi 0, %s107
      %s110 = sphi 0, %s109
      %s124 = sphi 0, %s110
      %s128 = sphi 0, %s128
      %s130 = sphi 0, %s128
      %s131 = sphi 0, %s130
      %s145 = sphi 0, %s131
      %s149 = sphi 0, %s149
      %s151 = sphi 0, %s149
      %s152 = sphi 0, %s151
      %s166 = sphi 0, %s152
      %s170 = sphi 0, %s170
      %s172 = sphi 0, %s170
      %s173 = sphi 0, %s172
      %s187 = sphi 0, %s173
      %s191 = sphi 0, %s191
      %s193 = sphi 0, %s191
      %s194 = sphi 0, %s193
      %s208 = sphi 0, %s194
      %s212 = sphi 0, %s212
      %s214 = sphi 0, %s212
      %s215 = sphi 0, %s214
      %s229 = sphi 0, %s215
      %s233 = sphi 0, %s233
      %s235 = sphi 0, %s233
      %s236 = sphi 0, %s235
      %s250 = sphi 0, %s236
      %s254 = sphi 0, %s254
      %s256 = sphi 0, %s254
      %s257 = sphi 0, %s256
      %s271 = sphi 0, %s257
      %s275 = sphi 0, %s275
      %s277 = sphi 0, %s275
      %s278 = sphi 0, %s277
      %s292 = sphi 0, %s278
      %s296 = sphi 0, %s296
      %s298 = sphi 0, %s296
      %s299 = sphi 0, %s298
      %s313 = sphi 0, %s299
      %s317 = sphi 0, %s317
      %s319 = sphi 0, %s317
      %s320 = sphi 0, %s319
      %s334 = sphi 0, %s320
      %s338 = sphi 0, %s338
      %s340 = sphi 0, %s338
      %s341 = sphi 0, %s340
      %s355 = sphi 0, %s341
      %s359 = sphi 0, %s359
      %s361 = sphi 0, %s359
      %s362 = sphi 0, %s361
      %s376 = sphi 0, %s362
      %s380 = sphi 0, %s380
      %s382 = sphi 0, %s380
      %s383 = sphi 0, %s382
      %s397 = sphi 0, %s383
      %s403 = sphi 0, %s405
      %s406 = sphi 0, %s403
      %s407 = sphi 0, %s406
      %s423 = sphi 0, %s407
      %s429 = sphi 0, %s431
      %s432 = sphi 0, %s429
      %s433 = sphi 0, %s432
      %s449 = sphi 0, %s433
    $region4: #{tpu_custom_call.1} parent=1 // loop_header_branch
      %34 = sbr.rel (%p32) target = $region8
    $region5: #{tpu_custom_call.1} parent=1 // loop_body
      %s36 = ssub.s32 %s31, 1
      %s37 = ssub.s32 %s31, 2
      %s38 = sadd.s32 %s31, 1
      %s39 = ssub.s32 %s31, %s38
      %p40 = scmp.eq.s32.totalorder %s39, 0
      %s42 = sadd.s32 %s41, 1
      %s43 = scalar_select %p40, %s41, %s42
      %p46 = pneg %p40
      %p47 = scmp.eq.s32.totalorder %s31, 1
      %p48 = por %p46, %p47
      %p49 = scmp.ne.s32.totalorder %s41, %s44
      %p50 = scmp.eq.s32.totalorder %s31, 0
      %p51 = por %p49, %p50
      %p52 = scmp.ne.s32.totalorder %s41, %s44
      %p53 = scmp.eq.s32.totalorder %s36, 1
      %p54 = por %p52, %p53
      %p55 = scmp.ne.s32.totalorder %s44, %s45
      %p56 = scmp.eq.s32.totalorder %s36, 0
      %p57 = por %p55, %p56
      %p58 = scmp.ne.s32.totalorder %s44, %s45
      %p59 = scmp.eq.s32.totalorder %s37, 1
      %p60 = por %p58, %p59
      %p62 = scmp.ne.s32.totalorder %s45, %s61
      %p63 = scmp.eq.s32.totalorder %s37, 0
      %p64 = por %p62, %p63
      %s66 = sadd.s32 %s65, 1
      %p69 = scmp.eq.s32.totalorder %s31, 1
      %p70 = scmp.ne.s32.totalorder %s65, %s67
      %p71 = scmp.eq.s32.totalorder %s31, 0
      %p72 = por %p70, %p71
      %p73 = scmp.ne.s32.totalorder %s65, %s67
      %p74 = scmp.eq.s32.totalorder %s36, 1
      %p75 = por %p73, %p74
      %p76 = scmp.ne.s32.totalorder %s67, %s68
      %p77 = scmp.eq.s32.totalorder %s36, 0
      %p78 = por %p76, %p77
      %p79 = scmp.ne.s32.totalorder %s67, %s68
      %p80 = scmp.eq.s32.totalorder %s37, 1
      %p81 = por %p79, %p80
      %p83 = scmp.ne.s32.totalorder %s68, %s82
      %p84 = scmp.eq.s32.totalorder %s37, 0
      %p85 = por %p83, %p84
      %s87 = sadd.s32 %s86, 1
      %p90 = scmp.eq.s32.totalorder %s31, 1
      %p91 = scmp.ne.s32.totalorder %s86, %s88
      %p92 = scmp.eq.s32.totalorder %s31, 0
      %p93 = por %p91, %p92
      %p94 = scmp.ne.s32.totalorder %s86, %s88
      %p95 = scmp.eq.s32.totalorder %s36, 1
      %p96 = por %p94, %p95
      %p97 = scmp.ne.s32.totalorder %s88, %s89
      %p98 = scmp.eq.s32.totalorder %s36, 0
      %p99 = por %p97, %p98
      %p100 = scmp.ne.s32.totalorder %s88, %s89
      %p101 = scmp.eq.s32.totalorder %s37, 1
      %p102 = por %p100, %p101
      %p104 = scmp.ne.s32.totalorder %s89, %s103
      %p105 = scmp.eq.s32.totalorder %s37, 0
      %p106 = por %p104, %p105
      %s108 = sadd.s32 %s107, 1
      %p111 = scmp.eq.s32.totalorder %s31, 1
      %p112 = scmp.ne.s32.totalorder %s107, %s109
      %p113 = scmp.eq.s32.totalorder %s31, 0
      %p114 = por %p112, %p113
      %p115 = scmp.ne.s32.totalorder %s107, %s109
      %p116 = scmp.eq.s32.totalorder %s36, 1
      %p117 = por %p115, %p116
      %p118 = scmp.ne.s32.totalorder %s109, %s110
      %p119 = scmp.eq.s32.totalorder %s36, 0
      %p120 = por %p118, %p119
      %p121 = scmp.ne.s32.totalorder %s109, %s110
      %p122 = scmp.eq.s32.totalorder %s37, 1
      %p123 = por %p121, %p122
      %p125 = scmp.ne.s32.totalorder %s110, %s124
      %p126 = scmp.eq.s32.totalorder %s37, 0
      %p127 = por %p125, %p126
      %s129 = sadd.s32 %s128, 1
      %p132 = scmp.eq.s32.totalorder %s31, 1
      %p133 = scmp.ne.s32.totalorder %s128, %s130
      %p134 = scmp.eq.s32.totalorder %s31, 0
      %p135 = por %p133, %p134
      %p136 = scmp.ne.s32.totalorder %s128, %s130
      %p137 = scmp.eq.s32.totalorder %s36, 1
      %p138 = por %p136, %p137
      %p139 = scmp.ne.s32.totalorder %s130, %s131
      %p140 = scmp.eq.s32.totalorder %s36, 0
      %p141 = por %p139, %p140
      %p142 = scmp.ne.s32.totalorder %s130, %s131
      %p143 = scmp.eq.s32.totalorder %s37, 1
      %p144 = por %p142, %p143
      %p146 = scmp.ne.s32.totalorder %s131, %s145
      %p147 = scmp.eq.s32.totalorder %s37, 0
      %p148 = por %p146, %p147
      %s150 = sadd.s32 %s149, 1
      %p153 = scmp.eq.s32.totalorder %s31, 1
      %p154 = scmp.ne.s32.totalorder %s149, %s151
      %p155 = scmp.eq.s32.totalorder %s31, 0
      %p156 = por %p154, %p155
      %p157 = scmp.ne.s32.totalorder %s149, %s151
      %p158 = scmp.eq.s32.totalorder %s36, 1
      %p159 = por %p157, %p158
      %p160 = scmp.ne.s32.totalorder %s151, %s152
      %p161 = scmp.eq.s32.totalorder %s36, 0
      %p162 = por %p160, %p161
      %p163 = scmp.ne.s32.totalorder %s151, %s152
      %p164 = scmp.eq.s32.totalorder %s37, 1
      %p165 = por %p163, %p164
      %p167 = scmp.ne.s32.totalorder %s152, %s166
      %p168 = scmp.eq.s32.totalorder %s37, 0
      %p169 = por %p167, %p168
      %s171 = sadd.s32 %s170, 1
      %p174 = scmp.eq.s32.totalorder %s31, 1
      %p175 = scmp.ne.s32.totalorder %s170, %s172
      %p176 = scmp.eq.s32.totalorder %s31, 0
      %p177 = por %p175, %p176
      %p178 = scmp.ne.s32.totalorder %s170, %s172
      %p179 = scmp.eq.s32.totalorder %s36, 1
      %p180 = por %p178, %p179
      %p181 = scmp.ne.s32.totalorder %s172, %s173
      %p182 = scmp.eq.s32.totalorder %s36, 0
      %p183 = por %p181, %p182
      %p184 = scmp.ne.s32.totalorder %s172, %s173
      %p185 = scmp.eq.s32.totalorder %s37, 1
      %p186 = por %p184, %p185
      %p188 = scmp.ne.s32.totalorder %s173, %s187
      %p189 = scmp.eq.s32.totalorder %s37, 0
      %p190 = por %p188, %p189
      %s192 = sadd.s32 %s191, 1
      %p195 = scmp.eq.s32.totalorder %s31, 1
      %p196 = scmp.ne.s32.totalorder %s191, %s193
      %p197 = scmp.eq.s32.totalorder %s31, 0
      %p198 = por %p196, %p197
      %p199 = scmp.ne.s32.totalorder %s191, %s193
      %p200 = scmp.eq.s32.totalorder %s36, 1
      %p201 = por %p199, %p200
      %p202 = scmp.ne.s32.totalorder %s193, %s194
      %p203 = scmp.eq.s32.totalorder %s36, 0
      %p204 = por %p202, %p203
      %p205 = scmp.ne.s32.totalorder %s193, %s194
      %p206 = scmp.eq.s32.totalorder %s37, 1
      %p207 = por %p205, %p206
      %p209 = scmp.ne.s32.totalorder %s194, %s208
      %p210 = scmp.eq.s32.totalorder %s37, 0
      %p211 = por %p209, %p210
      %s213 = sadd.s32 %s212, 1
      %p216 = scmp.eq.s32.totalorder %s31, 1
      %p217 = scmp.ne.s32.totalorder %s212, %s214
      %p218 = scmp.eq.s32.totalorder %s31, 0
      %p219 = por %p217, %p218
      %p220 = scmp.ne.s32.totalorder %s212, %s214
      %p221 = scmp.eq.s32.totalorder %s36, 1
      %p222 = por %p220, %p221
      %p223 = scmp.ne.s32.totalorder %s214, %s215
      %p224 = scmp.eq.s32.totalorder %s36, 0
      %p225 = por %p223, %p224
      %p226 = scmp.ne.s32.totalorder %s214, %s215
      %p227 = scmp.eq.s32.totalorder %s37, 1
      %p228 = por %p226, %p227
      %p230 = scmp.ne.s32.totalorder %s215, %s229
      %p231 = scmp.eq.s32.totalorder %s37, 0
      %p232 = por %p230, %p231
      %s234 = sadd.s32 %s233, 1
      %p237 = scmp.eq.s32.totalorder %s31, 1
      %p238 = scmp.ne.s32.totalorder %s233, %s235
      %p239 = scmp.eq.s32.totalorder %s31, 0
      %p240 = por %p238, %p239
      %p241 = scmp.ne.s32.totalorder %s233, %s235
      %p242 = scmp.eq.s32.totalorder %s36, 1
      %p243 = por %p241, %p242
      %p244 = scmp.ne.s32.totalorder %s235, %s236
      %p245 = scmp.eq.s32.totalorder %s36, 0
      %p246 = por %p244, %p245
      %p247 = scmp.ne.s32.totalorder %s235, %s236
      %p248 = scmp.eq.s32.totalorder %s37, 1
      %p249 = por %p247, %p248
      %p251 = scmp.ne.s32.totalorder %s236, %s250
      %p252 = scmp.eq.s32.totalorder %s37, 0
      %p253 = por %p251, %p252
      %s255 = sadd.s32 %s254, 1
      %p258 = scmp.eq.s32.totalorder %s31, 1
      %p259 = scmp.ne.s32.totalorder %s254, %s256
      %p260 = scmp.eq.s32.totalorder %s31, 0
      %p261 = por %p259, %p260
      %p262 = scmp.ne.s32.totalorder %s254, %s256
      %p263 = scmp.eq.s32.totalorder %s36, 1
      %p264 = por %p262, %p263
      %p265 = scmp.ne.s32.totalorder %s256, %s257
      %p266 = scmp.eq.s32.totalorder %s36, 0
      %p267 = por %p265, %p266
      %p268 = scmp.ne.s32.totalorder %s256, %s257
      %p269 = scmp.eq.s32.totalorder %s37, 1
      %p270 = por %p268, %p269
      %p272 = scmp.ne.s32.totalorder %s257, %s271
      %p273 = scmp.eq.s32.totalorder %s37, 0
      %p274 = por %p272, %p273
      %s276 = sadd.s32 %s275, 1
      %p279 = scmp.eq.s32.totalorder %s31, 1
      %p280 = scmp.ne.s32.totalorder %s275, %s277
      %p281 = scmp.eq.s32.totalorder %s31, 0
      %p282 = por %p280, %p281
      %p283 = scmp.ne.s32.totalorder %s275, %s277
      %p284 = scmp.eq.s32.totalorder %s36, 1
      %p285 = por %p283, %p284
      %p286 = scmp.ne.s32.totalorder %s277, %s278
      %p287 = scmp.eq.s32.totalorder %s36, 0
      %p288 = por %p286, %p287
      %p289 = scmp.ne.s32.totalorder %s277, %s278
      %p290 = scmp.eq.s32.totalorder %s37, 1
      %p291 = por %p289, %p290
      %p293 = scmp.ne.s32.totalorder %s278, %s292
      %p294 = scmp.eq.s32.totalorder %s37, 0
      %p295 = por %p293, %p294
      %s297 = sadd.s32 %s296, 1
      %p300 = scmp.eq.s32.totalorder %s31, 1
      %p301 = scmp.ne.s32.totalorder %s296, %s298
      %p302 = scmp.eq.s32.totalorder %s31, 0
      %p303 = por %p301, %p302
      %p304 = scmp.ne.s32.totalorder %s296, %s298
      %p305 = scmp.eq.s32.totalorder %s36, 1
      %p306 = por %p304, %p305
      %p307 = scmp.ne.s32.totalorder %s298, %s299
      %p308 = scmp.eq.s32.totalorder %s36, 0
      %p309 = por %p307, %p308
      %p310 = scmp.ne.s32.totalorder %s298, %s299
      %p311 = scmp.eq.s32.totalorder %s37, 1
      %p312 = por %p310, %p311
      %p314 = scmp.ne.s32.totalorder %s299, %s313
      %p315 = scmp.eq.s32.totalorder %s37, 0
      %p316 = por %p314, %p315
      %s318 = sadd.s32 %s317, 1
      %p321 = scmp.eq.s32.totalorder %s31, 1
      %p322 = scmp.ne.s32.totalorder %s317, %s319
      %p323 = scmp.eq.s32.totalorder %s31, 0
      %p324 = por %p322, %p323
      %p325 = scmp.ne.s32.totalorder %s317, %s319
      %p326 = scmp.eq.s32.totalorder %s36, 1
      %p327 = por %p325, %p326
      %p328 = scmp.ne.s32.totalorder %s319, %s320
      %p329 = scmp.eq.s32.totalorder %s36, 0
      %p330 = por %p328, %p329
      %p331 = scmp.ne.s32.totalorder %s319, %s320
      %p332 = scmp.eq.s32.totalorder %s37, 1
      %p333 = por %p331, %p332
      %p335 = scmp.ne.s32.totalorder %s320, %s334
      %p336 = scmp.eq.s32.totalorder %s37, 0
      %p337 = por %p335, %p336
      %s339 = sadd.s32 %s338, 1
      %p342 = scmp.eq.s32.totalorder %s31, 1
      %p343 = scmp.ne.s32.totalorder %s338, %s340
      %p344 = scmp.eq.s32.totalorder %s31, 0
      %p345 = por %p343, %p344
      %p346 = scmp.ne.s32.totalorder %s338, %s340
      %p347 = scmp.eq.s32.totalorder %s36, 1
      %p348 = por %p346, %p347
      %p349 = scmp.ne.s32.totalorder %s340, %s341
      %p350 = scmp.eq.s32.totalorder %s36, 0
      %p351 = por %p349, %p350
      %p352 = scmp.ne.s32.totalorder %s340, %s341
      %p353 = scmp.eq.s32.totalorder %s37, 1
      %p354 = por %p352, %p353
      %p356 = scmp.ne.s32.totalorder %s341, %s355
      %p357 = scmp.eq.s32.totalorder %s37, 0
      %p358 = por %p356, %p357
      %s360 = sadd.s32 %s359, 1
      %p363 = scmp.eq.s32.totalorder %s31, 1
      %p364 = scmp.ne.s32.totalorder %s359, %s361
      %p365 = scmp.eq.s32.totalorder %s31, 0
      %p366 = por %p364, %p365
      %p367 = scmp.ne.s32.totalorder %s359, %s361
      %p368 = scmp.eq.s32.totalorder %s36, 1
      %p369 = por %p367, %p368
      %p370 = scmp.ne.s32.totalorder %s361, %s362
      %p371 = scmp.eq.s32.totalorder %s36, 0
      %p372 = por %p370, %p371
      %p373 = scmp.ne.s32.totalorder %s361, %s362
      %p374 = scmp.eq.s32.totalorder %s37, 1
      %p375 = por %p373, %p374
      %p377 = scmp.ne.s32.totalorder %s362, %s376
      %p378 = scmp.eq.s32.totalorder %s37, 0
      %p379 = por %p377, %p378
      %s381 = sadd.s32 %s380, 1
      %p384 = scmp.eq.s32.totalorder %s31, 1
      %p385 = scmp.ne.s32.totalorder %s380, %s382
      %p386 = scmp.eq.s32.totalorder %s31, 0
      %p387 = por %p385, %p386
      %p388 = scmp.ne.s32.totalorder %s380, %s382
      %p389 = scmp.eq.s32.totalorder %s36, 1
      %p390 = por %p388, %p389
      %p391 = scmp.ne.s32.totalorder %s382, %s383
      %p392 = scmp.eq.s32.totalorder %s36, 0
      %p393 = por %p391, %p392
      %p394 = scmp.ne.s32.totalorder %s382, %s383
      %p395 = scmp.eq.s32.totalorder %s37, 1
      %p396 = por %p394, %p395
      %p398 = scmp.ne.s32.totalorder %s383, %s397
      %p399 = scmp.eq.s32.totalorder %s37, 0
      %p400 = por %p398, %p399
      %s401 = ssub.s32 %s31, %s38
      %p402 = scmp.eq.s32.totalorder %s401, 0
      %s404 = sadd.s32 %s403, 1
      %s405 = scalar_select %p402, %s403, %s404
      %p408 = pneg %p402
      %p409 = scmp.eq.s32.totalorder %s31, 1
      %p410 = por %p408, %p409
      %p411 = scmp.ne.s32.totalorder %s403, %s406
      %p412 = scmp.eq.s32.totalorder %s31, 0
      %p413 = por %p411, %p412
      %p414 = scmp.ne.s32.totalorder %s403, %s406
      %p415 = scmp.eq.s32.totalorder %s36, 1
      %p416 = por %p414, %p415
      %p417 = scmp.ne.s32.totalorder %s406, %s407
      %p418 = scmp.eq.s32.totalorder %s36, 0
      %p419 = por %p417, %p418
      %p420 = scmp.ne.s32.totalorder %s406, %s407
      %p421 = scmp.eq.s32.totalorder %s37, 1
      %p422 = por %p420, %p421
      %p424 = scmp.ne.s32.totalorder %s407, %s423
      %p425 = scmp.eq.s32.totalorder %s37, 0
      %p426 = por %p424, %p425
      %s427 = ssub.s32 %s31, %s38
      %p428 = scmp.eq.s32.totalorder %s427, 0
      %s430 = sadd.s32 %s429, 1
      %s431 = scalar_select %p428, %s429, %s430
      %p434 = pneg %p428
      %p435 = scmp.eq.s32.totalorder %s31, 1
      %p436 = por %p434, %p435
      %p437 = scmp.ne.s32.totalorder %s429, %s432
      %p438 = scmp.eq.s32.totalorder %s31, 0
      %p439 = por %p437, %p438
      %p440 = scmp.ne.s32.totalorder %s429, %s432
      %p441 = scmp.eq.s32.totalorder %s36, 1
      %p442 = por %p440, %p441
      %p443 = scmp.ne.s32.totalorder %s432, %s433
      %p444 = scmp.eq.s32.totalorder %s36, 0
      %p445 = por %p443, %p444
      %p446 = scmp.ne.s32.totalorder %s432, %s433
      %p447 = scmp.eq.s32.totalorder %s37, 1
      %p448 = por %p446, %p447
      %p450 = scmp.ne.s32.totalorder %s433, %s449
      %p451 = scmp.eq.s32.totalorder %s37, 0
      %p452 = por %p450, %p451
      %p453 = scmp.le.s32.totalorder 1, %s31
      %p454 = scmp.lt.s32.totalorder %s31, 3
      %p455 = pnand %p453, %p454
      %p456 = pneg %p455
      // Predicated region
      $region9: #{tpu_custom_call.1} parent=5 // pred_check
        _
      $region10: #{tpu_custom_call.1} parent=5 // pred_check_branch
        %458 = sbr.rel (%p455) target = $region12
      $region11: #{tpu_custom_call.1} parent=5 // pred_region
        %s459 = ssub.s32 %s31, 1
        // Predicated region
        $region13: #{tpu_custom_call.1} parent=11 // pred_check
          %p460 = pneg %p78
        $region14: #{tpu_custom_call.1} parent=11 // pred_check_branch
          %462 = sbr.rel (%p460) target = $region16
        $region15: #{tpu_custom_call.1} parent=11 // pred_region
          _
        $region16: #{tpu_custom_call.1} parent=11 // pred_fallthru
          _
        // Predicated region
        $region17: #{tpu_custom_call.1} parent=11 // pred_check
          %p463 = pneg %p99
        $region18: #{tpu_custom_call.1} parent=11 // pred_check_branch
          %465 = sbr.rel (%p463) target = $region20
        $region19: #{tpu_custom_call.1} parent=11 // pred_region
          _
        $region20: #{tpu_custom_call.1} parent=11 // pred_fallthru
          _
        // Predicated region
        $region21: #{tpu_custom_call.1} parent=11 // pred_check
          %p466 = pneg %p120
        $region22: #{tpu_custom_call.1} parent=11 // pred_check_branch
          %468 = sbr.rel (%p466) target = $region24
        $region23: #{tpu_custom_call.1} parent=11 // pred_region
          _
        $region24: #{tpu_custom_call.1} parent=11 // pred_fallthru
          _
        // Predicated region
        $region25: #{tpu_custom_call.1} parent=11 // pred_check
          %p469 = pneg %p141
        $region26: #{tpu_custom_call.1} parent=11 // pred_check_branch
          %471 = sbr.rel (%p469) target = $region28
        $region27: #{tpu_custom_call.1} parent=11 // pred_region
          _
        $region28: #{tpu_custom_call.1} parent=11 // pred_fallthru
          _
        // Predicated region
        $region29: #{tpu_custom_call.1} parent=11 // pred_check
          %p472 = pneg %p162
        $region30: #{tpu_custom_call.1} parent=11 // pred_check_branch
          %474 = sbr.rel (%p472) target = $region32
        $region31: #{tpu_custom_call.1} parent=11 // pred_region
          _
        $region32: #{tpu_custom_call.1} parent=11 // pred_fallthru
          _
        // Predicated region
        $region33: #{tpu_custom_call.1} parent=11 // pred_check
          %p475 = pneg %p183
        $region34: #{tpu_custom_call.1} parent=11 // pred_check_branch
          %477 = sbr.rel (%p475) target = $region36
        $region35: #{tpu_custom_call.1} parent=11 // pred_region
          _
        $region36: #{tpu_custom_call.1} parent=11 // pred_fallthru
          _
        // Predicated region
        $region37: #{tpu_custom_call.1} parent=11 // pred_check
          %p478 = pneg %p204
        $region38: #{tpu_custom_call.1} parent=11 // pred_check_branch
          %480 = sbr.rel (%p478) target = $region40
        $region39: #{tpu_custom_call.1} parent=11 // pred_region
          _
        $region40: #{tpu_custom_call.1} parent=11 // pred_fallthru
          _
        // Predicated region
        $region41: #{tpu_custom_call.1} parent=11 // pred_check
          %p481 = pneg %p225
        $region42: #{tpu_custom_call.1} parent=11 // pred_check_branch
          %483 = sbr.rel (%p481) target = $region44
        $region43: #{tpu_custom_call.1} parent=11 // pred_region
          _
        $region44: #{tpu_custom_call.1} parent=11 // pred_fallthru
          _
        // Predicated region
        $region45: #{tpu_custom_call.1} parent=11 // pred_check
          %p484 = pneg %p246
        $region46: #{tpu_custom_call.1} parent=11 // pred_check_branch
          %486 = sbr.rel (%p484) target = $region48
        $region47: #{tpu_custom_call.1} parent=11 // pred_region
          _
        $region48: #{tpu_custom_call.1} parent=11 // pred_fallthru
          _
        // Predicated region
        $region49: #{tpu_custom_call.1} parent=11 // pred_check
          %p487 = pneg %p267
        $region50: #{tpu_custom_call.1} parent=11 // pred_check_branch
          %489 = sbr.rel (%p487) target = $region52
        $region51: #{tpu_custom_call.1} parent=11 // pred_region
          _
        $region52: #{tpu_custom_call.1} parent=11 // pred_fallthru
          _
        // Predicated region
        $region53: #{tpu_custom_call.1} parent=11 // pred_check
          %p490 = pneg %p288
        $region54: #{tpu_custom_call.1} parent=11 // pred_check_branch
          %492 = sbr.rel (%p490) target = $region56
        $region55: #{tpu_custom_call.1} parent=11 // pred_region
          _
        $region56: #{tpu_custom_call.1} parent=11 // pred_fallthru
          _
        // Predicated region
        $region57: #{tpu_custom_call.1} parent=11 // pred_check
          %p493 = pneg %p309
        $region58: #{tpu_custom_call.1} parent=11 // pred_check_branch
          %495 = sbr.rel (%p493) target = $region60
        $region59: #{tpu_custom_call.1} parent=11 // pred_region
          _
        $region60: #{tpu_custom_call.1} parent=11 // pred_fallthru
          _
        // Predicated region
        $region61: #{tpu_custom_call.1} parent=11 // pred_check
          %p496 = pneg %p330
        $region62: #{tpu_custom_call.1} parent=11 // pred_check_branch
          %498 = sbr.rel (%p496) target = $region64
        $region63: #{tpu_custom_call.1} parent=11 // pred_region
          _
        $region64: #{tpu_custom_call.1} parent=11 // pred_fallthru
          _
        // Predicated region
        $region65: #{tpu_custom_call.1} parent=11 // pred_check
          %p499 = pneg %p351
        $region66: #{tpu_custom_call.1} parent=11 // pred_check_branch
          %501 = sbr.rel (%p499) target = $region68
        $region67: #{tpu_custom_call.1} parent=11 // pred_region
          _
        $region68: #{tpu_custom_call.1} parent=11 // pred_fallthru
          _
        // Predicated region
        $region69: #{tpu_custom_call.1} parent=11 // pred_check
          %p502 = pneg %p372
        $region70: #{tpu_custom_call.1} parent=11 // pred_check_branch
          %504 = sbr.rel (%p502) target = $region72
        $region71: #{tpu_custom_call.1} parent=11 // pred_region
          _
        $region72: #{tpu_custom_call.1} parent=11 // pred_fallthru
          _
        // Predicated region
        $region73: #{tpu_custom_call.1} parent=11 // pred_check
          %p505 = pneg %p393
        $region74: #{tpu_custom_call.1} parent=11 // pred_check_branch
          %507 = sbr.rel (%p505) target = $region76
        $region75: #{tpu_custom_call.1} parent=11 // pred_region
          _
        $region76: #{tpu_custom_call.1} parent=11 // pred_fallthru
          _
      $region12: #{tpu_custom_call.1} parent=5 // pred_fallthru
        _
      %p508 = scmp.lt.s32.totalorder %s31, 2
      // Predicated region
      $region77: #{tpu_custom_call.1} parent=5 // pred_check
        %p509 = pneg %p508
      $region78: #{tpu_custom_call.1} parent=5 // pred_check_branch
        %511 = sbr.rel (%p509) target = $region80
      $region79: #{tpu_custom_call.1} parent=5 // pred_region
        // Predicated region
        $region81: #{tpu_custom_call.1} parent=79 // pred_check
          %p512 = pneg %p51
        $region82: #{tpu_custom_call.1} parent=79 // pred_check_branch
          %514 = sbr.rel (%p512) target = $region84
        $region83: #{tpu_custom_call.1} parent=79 // pred_region
          %s515 = smul.u32 16, %s31
          %p516 = scmp.lt.s32.totalorder %s515, 31
          %s517 = scalar_select %p516, %s515, 31
          %s518 = smul.addr %s517, 8
          %s519 = scalar_lea.vmem %s0, %s518
          %s520 = smul.u32 16, %s31
        $region84: #{tpu_custom_call.1} parent=79 // pred_fallthru
          _
      $region80: #{tpu_custom_call.1} parent=5 // pred_fallthru
        _
      %p521 = scmp.le.s32.totalorder 1, %s31
      %p522 = scmp.lt.s32.totalorder %s31, 3
      %p523 = pnand %p521, %p522
      %p524 = pneg %p523
      // Predicated region
      $region85: #{tpu_custom_call.1} parent=5 // pred_check
        _
      $region86: #{tpu_custom_call.1} parent=5 // pred_check_branch
        %526 = sbr.rel (%p523) target = $region88
      $region87: #{tpu_custom_call.1} parent=5 // pred_region
        %s527 = ssub.s32 %s31, 1
        %s528 = smul.u32 16, %s36
        %p529 = scmp.lt.s32.totalorder %s528, 31
        %s530 = scalar_select %p529, %s528, 31
        %s531 = smul.addr %s530, 8
        %s532 = scalar_lea.vmem %s0, %s531
        %p533 = pneg %p57
        %p534 = pneg %p54
        %p535 = pneg %p78
        %p536 = pneg %p75
        %p537 = pneg %p99
        %p538 = pneg %p96
        %p539 = pneg %p120
        %p540 = pneg %p117
        %p541 = pneg %p141
        %p542 = pneg %p138
        %p543 = pneg %p162
        %p544 = pneg %p159
        %p545 = pneg %p183
        %p546 = pneg %p180
        %p547 = pneg %p204
        %p548 = pneg %p201
        %p549 = pneg %p225
        %p550 = pneg %p222
        %p551 = pneg %p246
        %p552 = pneg %p243
        %p553 = pneg %p267
        %p554 = pneg %p264
        %p555 = pneg %p288
        %p556 = pneg %p285
        %p557 = pneg %p309
        %p558 = pneg %p306
        %p559 = pneg %p330
        %p560 = pneg %p327
        %p561 = pneg %p351
        %p562 = pneg %p348
        %p563 = pneg %p372
        %p564 = pneg %p369
        %p565 = pneg %p393
        %p566 = pneg %p390
        %p567 = pneg %p419
        %p568 = pneg %p416
        %s569 = sand.u32 %s406, 1
        %s570 = scalar_lea.sflag [#allocation3], %s569
        %s571 = sand.u32 %s406, 1
        %s572 = smul.addr %s571, 128
        %s573 = scalar_lea.vmem [#allocation2], %s572
        %p574 = pneg %p445
        %p575 = pneg %p442
        %s576 = sand.u32 %s432, 1
        %s577 = scalar_lea.sflag [#allocation5], %s576
        %s578 = sand.u32 %s432, 1
        %s579 = smul.addr %s578, 128
        %s580 = scalar_lea.vmem [#allocation4], %s579
        %s581 = smul.u32 16, %s36
        %p582 = scmp.lt.s32.totalorder %s581, 31
        %s583 = scalar_select %p582, %s581, 31
        %s584 = smul.addr %s583, 8
        %s585 = scalar_lea.vmem %s0, %s584
        %s586 = smul.u32 16, %s36
        %s587 = smul.u32 16, %s36
        %s588 = smul.u32 16, %s36
        %v590 = vld [vmem:[%s585] sm:$0xff]
        %v591 = vld [vmem:[%s585 + $0x8] sm:$0xff]
        %v592 = vld [vmem:[%s585 + $0x10] sm:$0xff]
        %v593 = vld [vmem:[%s585 + $0x18] sm:$0xff]
        %v594 = vld [vmem:[%s585 + $0x20] sm:$0xff]
        %v595 = vld [vmem:[%s585 + $0x28] sm:$0xff]
        %v596 = vld [vmem:[%s585 + $0x30] sm:$0xff]
        %v597 = vld [vmem:[%s585 + $0x38] sm:$0xff]
        %v598 = vld [vmem:[%s585 + $0x40] sm:$0xff]
        %v599 = vld [vmem:[%s585 + $0x48] sm:$0xff]
        %v600 = vld [vmem:[%s585 + $0x50] sm:$0xff]
        %v601 = vld [vmem:[%s585 + $0x58] sm:$0xff]
        %v602 = vld [vmem:[%s585 + $0x60] sm:$0xff]
        %v603 = vld [vmem:[%s585 + $0x68] sm:$0xff]
        %v604 = vld [vmem:[%s585 + $0x70] sm:$0xff]
        %v605 = vld [vmem:[%s585 + $0x78] sm:$0xff]
        %v606 = vpack.c.bf16 %v591, %v590
        %v607 = vpack.c.bf16 %v593, %v592
        %v608 = vpack.c.bf16 %v595, %v594
        %v609 = vpack.c.bf16 %v597, %v596
        %v610 = vpack.c.bf16 %v599, %v598
        %v611 = vpack.c.bf16 %v601, %v600
        %v612 = vpack.c.bf16 %v603, %v602
        %v613 = vpack.c.bf16 %v605, %v604
        %v614 = vld [vmem:[%s1] sm:$0xf]
        %v615 = vld [vmem:[%s1 + $0x4] sm:$0xf]
        %v616 = vld [vmem:[%s1 + $0x8] sm:$0xf]
        %v617 = vld [vmem:[%s1 + $0xc] sm:$0xf]
        %v618 = vld [vmem:[%s2] sm:$0x1]
        %v620 = vperm.slane %v618, 0
        %v626 = vunpack.c.l.b16 %v614
        %v627 = vunpack.c.l.b16 %v615
        %v628 = vunpack.c.l.b16 %v616
        %v629 = vunpack.c.l.b16 %v617
        %v630 = vpack.c.b16 %v627, %v626
        %v631 = vpack.c.b16 %v629, %v628
        %vm634 = vcmask 261120
        %v636 = vsel %vm634, %v606, 0
        %v639 = vsel %vm634, %v607, 0
        %v642 = vsel %vm634, %v608, 0
        %v645 = vsel %vm634, %v609, 0
        %v648 = vsel %vm634, %v610, 0
        %v651 = vsel %vm634, %v611, 0
        %v654 = vsel %vm634, %v612, 0
        %v657 = vsel %vm634, %v613, 0
        %659 = vmatpush.bf16.msra.mxu0 0
        %660 = vmatpush.bf16.msra.mxu0 0
        %661 = vmatpush.bf16.msra.mxu0 0
        %662 = vmatpush.bf16.msra.mxu0 0
        %663 = vmatpush.bf16.msra.mxu0 0
        %664 = vmatpush.bf16.msra.mxu0 0
        %665 = vmatpush.bf16.msra.mxu0 %v631
        %666 = vmatpush.bf16.msra.mxu0 %v630
        %667 = vmatmul.bf16.gmra.mxu0 %v636
        %v668 = vpop.f32.mrf.mxu0
        %v669 = vadd.f32 %v620, %v668
        %v670 = vpop.f32.mrf.mxu0
        %v671 = vadd.f32 %v620, %v670
        %672 = vmatmul.bf16.gmra.mxu0 %v639
        %v673 = vpop.f32.mrf.mxu0
        %v674 = vadd.f32 %v620, %v673
        %v675 = vpop.f32.mrf.mxu0
        %v676 = vadd.f32 %v620, %v675
        %677 = vmatmul.bf16.gmra.mxu0 %v642
        %v678 = vpop.f32.mrf.mxu0
        %v679 = vadd.f32 %v620, %v678
        %v680 = vpop.f32.mrf.mxu0
        %v681 = vadd.f32 %v620, %v680
        %682 = vmatmul.bf16.gmra.mxu0 %v645
        %v683 = vpop.f32.mrf.mxu0
        %v684 = vadd.f32 %v620, %v683
        %v685 = vpop.f32.mrf.mxu0
        %v686 = vadd.f32 %v620, %v685
        %687 = vmatmul.bf16.gmra.mxu0 %v648
        %v688 = vpop.f32.mrf.mxu0
        %v689 = vadd.f32 %v620, %v688
        %v690 = vpop.f32.mrf.mxu0
        %v691 = vadd.f32 %v620, %v690
        %692 = vmatmul.bf16.gmra.mxu0 %v651
        %v693 = vpop.f32.mrf.mxu0
        %v694 = vadd.f32 %v620, %v693
        %v695 = vpop.f32.mrf.mxu0
        %v696 = vadd.f32 %v620, %v695
        %697 = vmatmul.bf16.gmra.mxu0 %v654
        %v698 = vpop.f32.mrf.mxu0
        %v699 = vadd.f32 %v620, %v698
        %v700 = vpop.f32.mrf.mxu0
        %v701 = vadd.f32 %v620, %v700
        %702 = vmatmul.bf16.gmra.mxu0 %v657
        %v703 = vpop.f32.mrf.mxu0
        %v704 = vadd.f32 %v620, %v703
        %v705 = vpop.f32.mrf.mxu0
        %v706 = vadd.f32 %v620, %v705
        %707 = vdwg.mxu0
        %v708 = vmax.f32 %v669, 0.0
        %v709 = vmax.f32 %v671, 0.0
        %v710 = vmax.f32 %v674, 0.0
        %v711 = vmax.f32 %v676, 0.0
        %v712 = vmax.f32 %v679, 0.0
        %v713 = vmax.f32 %v681, 0.0
        %v714 = vmax.f32 %v684, 0.0
        %v715 = vmax.f32 %v686, 0.0
        %v716 = vmax.f32 %v689, 0.0
        %v717 = vmax.f32 %v691, 0.0
        %v718 = vmax.f32 %v694, 0.0
        %v719 = vmax.f32 %v696, 0.0
        %v720 = vmax.f32 %v699, 0.0
        %v721 = vmax.f32 %v701, 0.0
        %v722 = vmax.f32 %v704, 0.0
        %v723 = vmax.f32 %v706, 0.0
        %v724 = vpack.c.bf16 %v709, %v708
        %v725 = vpack.c.bf16 %v711, %v710
        %v726 = vpack.c.bf16 %v713, %v712
        %v727 = vpack.c.bf16 %v715, %v714
        %v728 = vpack.c.bf16 %v717, %v716
        %v729 = vpack.c.bf16 %v719, %v718
        %v730 = vpack.c.bf16 %v721, %v720
        %v731 = vpack.c.bf16 %v723, %v722
        %v732 = vld [vmem:[%s3] sm:$0xf]
        %v733 = vld [vmem:[%s3 + $0x4] sm:$0xf]
        %v734 = vld [vmem:[%s3 + $0x8] sm:$0xf]
        %v735 = vld [vmem:[%s3 + $0xc] sm:$0xf]
        %v736 = vld [vmem:[%s3 + $0x10] sm:$0xf]
        %v737 = vld [vmem:[%s3 + $0x14] sm:$0xf]
        %v738 = vld [vmem:[%s3 + $0x18] sm:$0xf]
        %v739 = vld [vmem:[%s3 + $0x1c] sm:$0xf]
        %v740 = vld [vmem:[%s4] sm:$0x1]
        %v742 = vperm.slane %v740, 0
        %v752 = vunpack.c.l.b16 %v732
        %v753 = vunpack.c.l.b16 %v733
        %v754 = vunpack.c.l.b16 %v734
        %v755 = vunpack.c.l.b16 %v735
        %v756 = vunpack.c.l.b16 %v736
        %v757 = vunpack.c.l.b16 %v737
        %v758 = vunpack.c.l.b16 %v738
        %v759 = vunpack.c.l.b16 %v739
        %v760 = vpack.c.b16 %v753, %v752
        %v761 = vpack.c.b16 %v755, %v754
        %v762 = vpack.c.b16 %v757, %v756
        %v763 = vpack.c.b16 %v759, %v758
        %vm768 = vcmask 523264
        %v770 = vsel %vm768, %v724, 0
        %v773 = vsel %vm768, %v725, 0
        %v776 = vsel %vm768, %v726, 0
        %v779 = vsel %vm768, %v727, 0
        %v782 = vsel %vm768, %v728, 0
        %v785 = vsel %vm768, %v729, 0
        %v788 = vsel %vm768, %v730, 0
        %v791 = vsel %vm768, %v731, 0
        %793 = vmatpush.bf16.msra.mxu0 0
        %794 = vmatpush.bf16.msra.mxu0 0
        %795 = vmatpush.bf16.msra.mxu0 0
        %796 = vmatpush.bf16.msra.mxu0 0
        %797 = vmatpush.bf16.msra.mxu0 %v763
        %798 = vmatpush.bf16.msra.mxu0 %v762
        %799 = vmatpush.bf16.msra.mxu0 %v761
        %800 = vmatpush.bf16.msra.mxu0 %v760
        %801 = vmatmul.bf16.gmra.mxu0 %v770
        %v802 = vpop.f32.mrf.mxu0
        %v803 = vadd.f32 %v742, %v802
        %v804 = vpop.f32.mrf.mxu0
        %v805 = vadd.f32 %v742, %v804
        %806 = vmatmul.bf16.gmra.mxu0 %v773
        %v807 = vpop.f32.mrf.mxu0
        %v808 = vadd.f32 %v742, %v807
        %v809 = vpop.f32.mrf.mxu0
        %v810 = vadd.f32 %v742, %v809
        %811 = vmatmul.bf16.gmra.mxu0 %v776
        %v812 = vpop.f32.mrf.mxu0
        %v813 = vadd.f32 %v742, %v812
        %v814 = vpop.f32.mrf.mxu0
        %v815 = vadd.f32 %v742, %v814
        %816 = vmatmul.bf16.gmra.mxu0 %v779
        %v817 = vpop.f32.mrf.mxu0
        %v818 = vadd.f32 %v742, %v817
        %v819 = vpop.f32.mrf.mxu0
        %v820 = vadd.f32 %v742, %v819
        %821 = vmatmul.bf16.gmra.mxu0 %v782
        %v822 = vpop.f32.mrf.mxu0
        %v823 = vadd.f32 %v742, %v822
        %v824 = vpop.f32.mrf.mxu0
        %v825 = vadd.f32 %v742, %v824
        %826 = vmatmul.bf16.gmra.mxu0 %v785
        %v827 = vpop.f32.mrf.mxu0
        %v828 = vadd.f32 %v742, %v827
        %v829 = vpop.f32.mrf.mxu0
        %v830 = vadd.f32 %v742, %v829
        %831 = vmatmul.bf16.gmra.mxu0 %v788
        %v832 = vpop.f32.mrf.mxu0
        %v833 = vadd.f32 %v742, %v832
        %v834 = vpop.f32.mrf.mxu0
        %v835 = vadd.f32 %v742, %v834
        %836 = vmatmul.bf16.gmra.mxu0 %v791
        %v837 = vpop.f32.mrf.mxu0
        %v838 = vadd.f32 %v742, %v837
        %v839 = vpop.f32.mrf.mxu0
        %v840 = vadd.f32 %v742, %v839
        %841 = vdwg.mxu0
        %v842 = vmax.f32 %v803, 0.0
        %v843 = vmax.f32 %v805, 0.0
        %v844 = vmax.f32 %v808, 0.0
        %v845 = vmax.f32 %v810, 0.0
        %v846 = vmax.f32 %v813, 0.0
        %v847 = vmax.f32 %v815, 0.0
        %v848 = vmax.f32 %v818, 0.0
        %v849 = vmax.f32 %v820, 0.0
        %v850 = vmax.f32 %v823, 0.0
        %v851 = vmax.f32 %v825, 0.0
        %v852 = vmax.f32 %v828, 0.0
        %v853 = vmax.f32 %v830, 0.0
        %v854 = vmax.f32 %v833, 0.0
        %v855 = vmax.f32 %v835, 0.0
        %v856 = vmax.f32 %v838, 0.0
        %v857 = vmax.f32 %v840, 0.0
        %v858 = vpack.c.bf16 %v843, %v842
        %v859 = vpack.c.bf16 %v845, %v844
        %v860 = vpack.c.bf16 %v847, %v846
        %v861 = vpack.c.bf16 %v849, %v848
        %v862 = vpack.c.bf16 %v851, %v850
        %v863 = vpack.c.bf16 %v853, %v852
        %v864 = vpack.c.bf16 %v855, %v854
        %v865 = vpack.c.bf16 %v857, %v856
        %v866 = vld [vmem:[%s5] sm:$0xf]
        %v867 = vld [vmem:[%s5 + $0x4] sm:$0xf]
        %v868 = vld [vmem:[%s5 + $0x8] sm:$0xf]
        %v869 = vld [vmem:[%s5 + $0xc] sm:$0xf]
        %v870 = vld [vmem:[%s5 + $0x10] sm:$0xf]
        %v871 = vld [vmem:[%s5 + $0x14] sm:$0xf]
        %v872 = vld [vmem:[%s5 + $0x18] sm:$0xf]
        %v873 = vld [vmem:[%s5 + $0x1c] sm:$0xf]
        %v874 = vld [vmem:[%s6] sm:$0x1]
        %v876 = vperm.slane %v874, 0
        %v886 = vunpack.c.l.b16 %v866
        %v887 = vunpack.c.l.b16 %v867
        %v888 = vunpack.c.l.b16 %v868
        %v889 = vunpack.c.l.b16 %v869
        %v890 = vunpack.c.l.b16 %v870
        %v891 = vunpack.c.l.b16 %v871
        %v892 = vunpack.c.l.b16 %v872
        %v893 = vunpack.c.l.b16 %v873
        %v894 = vpack.c.b16 %v887, %v886
        %v895 = vpack.c.b16 %v889, %v888
        %v896 = vpack.c.b16 %v891, %v890
        %v897 = vpack.c.b16 %v893, %v892
        %v903 = vsel %vm768, %v858, 0
        %v906 = vsel %vm768, %v859, 0
        %v909 = vsel %vm768, %v860, 0
        %v912 = vsel %vm768, %v861, 0
        %v915 = vsel %vm768, %v862, 0
        %v918 = vsel %vm768, %v863, 0
        %v921 = vsel %vm768, %v864, 0
        %v924 = vsel %vm768, %v865, 0
        %926 = vmatpush.bf16.msra.mxu0 0
        %927 = vmatpush.bf16.msra.mxu0 0
        %928 = vmatpush.bf16.msra.mxu0 0
        %929 = vmatpush.bf16.msra.mxu0 0
        %930 = vmatpush.bf16.msra.mxu0 %v897
        %931 = vmatpush.bf16.msra.mxu0 %v896
        %932 = vmatpush.bf16.msra.mxu0 %v895
        %933 = vmatpush.bf16.msra.mxu0 %v894
        %934 = vmatmul.bf16.gmra.mxu0 %v903
        %v935 = vpop.f32.mrf.mxu0
        %v936 = vadd.f32 %v876, %v935
        %v937 = vpop.f32.mrf.mxu0
        %v938 = vadd.f32 %v876, %v937
        %939 = vmatmul.bf16.gmra.mxu0 %v906
        %v940 = vpop.f32.mrf.mxu0
        %v941 = vadd.f32 %v876, %v940
        %v942 = vpop.f32.mrf.mxu0
        %v943 = vadd.f32 %v876, %v942
        %944 = vmatmul.bf16.gmra.mxu0 %v909
        %v945 = vpop.f32.mrf.mxu0
        %v946 = vadd.f32 %v876, %v945
        %v947 = vpop.f32.mrf.mxu0
        %v948 = vadd.f32 %v876, %v947
        %949 = vmatmul.bf16.gmra.mxu0 %v912
        %v950 = vpop.f32.mrf.mxu0
        %v951 = vadd.f32 %v876, %v950
        %v952 = vpop.f32.mrf.mxu0
        %v953 = vadd.f32 %v876, %v952
        %954 = vmatmul.bf16.gmra.mxu0 %v915
        %v955 = vpop.f32.mrf.mxu0
        %v956 = vadd.f32 %v876, %v955
        %v957 = vpop.f32.mrf.mxu0
        %v958 = vadd.f32 %v876, %v957
        %959 = vmatmul.bf16.gmra.mxu0 %v918
        %v960 = vpop.f32.mrf.mxu0
        %v961 = vadd.f32 %v876, %v960
        %v962 = vpop.f32.mrf.mxu0
        %v963 = vadd.f32 %v876, %v962
        %964 = vmatmul.bf16.gmra.mxu0 %v921
        %v965 = vpop.f32.mrf.mxu0
        %v966 = vadd.f32 %v876, %v965
        %v967 = vpop.f32.mrf.mxu0
        %v968 = vadd.f32 %v876, %v967
        %969 = vmatmul.bf16.gmra.mxu0 %v924
        %v970 = vpop.f32.mrf.mxu0
        %v971 = vadd.f32 %v876, %v970
        %v972 = vpop.f32.mrf.mxu0
        %v973 = vadd.f32 %v876, %v972
        %974 = vdwg.mxu0
        %v975 = vmax.f32 %v936, 0.0
        %v976 = vmax.f32 %v938, 0.0
        %v977 = vmax.f32 %v941, 0.0
        %v978 = vmax.f32 %v943, 0.0
        %v979 = vmax.f32 %v946, 0.0
        %v980 = vmax.f32 %v948, 0.0
        %v981 = vmax.f32 %v951, 0.0
        %v982 = vmax.f32 %v953, 0.0
        %v983 = vmax.f32 %v956, 0.0
        %v984 = vmax.f32 %v958, 0.0
        %v985 = vmax.f32 %v961, 0.0
        %v986 = vmax.f32 %v963, 0.0
        %v987 = vmax.f32 %v966, 0.0
        %v988 = vmax.f32 %v968, 0.0
        %v989 = vmax.f32 %v971, 0.0
        %v990 = vmax.f32 %v973, 0.0
        %v991 = vpack.c.bf16 %v976, %v975
        %v992 = vpack.c.bf16 %v978, %v977
        %v993 = vpack.c.bf16 %v980, %v979
        %v994 = vpack.c.bf16 %v982, %v981
        %v995 = vpack.c.bf16 %v984, %v983
        %v996 = vpack.c.bf16 %v986, %v985
        %v997 = vpack.c.bf16 %v988, %v987
        %v998 = vpack.c.bf16 %v990, %v989
        %v999 = vld [vmem:[%s7] sm:$0xf]
        %v1000 = vld [vmem:[%s7 + $0x4] sm:$0xf]
        %v1001 = vld [vmem:[%s7 + $0x8] sm:$0xf]
        %v1002 = vld [vmem:[%s7 + $0xc] sm:$0xf]
        %v1003 = vld [vmem:[%s7 + $0x10] sm:$0xf]
        %v1004 = vld [vmem:[%s7 + $0x14] sm:$0xf]
        %v1005 = vld [vmem:[%s7 + $0x18] sm:$0xf]
        %v1006 = vld [vmem:[%s7 + $0x1c] sm:$0xf]
        %v1007 = vld [vmem:[%s7 + $0x20] sm:$0xf]
        %v1008 = vld [vmem:[%s7 + $0x24] sm:$0xf]
        %v1009 = vld [vmem:[%s7 + $0x28] sm:$0xf]
        %v1010 = vld [vmem:[%s7 + $0x2c] sm:$0xf]
        %v1011 = vld [vmem:[%s7 + $0x30] sm:$0xf]
        %v1012 = vld [vmem:[%s7 + $0x34] sm:$0xf]
        %v1013 = vld [vmem:[%s7 + $0x38] sm:$0xf]
        %v1014 = vld [vmem:[%s7 + $0x3c] sm:$0xf]
        %v1015 = vld [vmem:[%s8] sm:$0x1]
        %v1017 = vperm.slane %v1015, 0
        %v1035 = vunpack.c.l.b16 %v999
        %v1036 = vunpack.c.l.b16 %v1000
        %v1037 = vunpack.c.l.b16 %v1001
        %v1038 = vunpack.c.l.b16 %v1002
        %v1039 = vunpack.c.l.b16 %v1003
        %v1040 = vunpack.c.l.b16 %v1004
        %v1041 = vunpack.c.l.b16 %v1005
        %v1042 = vunpack.c.l.b16 %v1006
        %v1043 = vunpack.c.l.b16 %v1007
        %v1044 = vunpack.c.l.b16 %v1008
        %v1045 = vunpack.c.l.b16 %v1009
        %v1046 = vunpack.c.l.b16 %v1010
        %v1047 = vunpack.c.l.b16 %v1011
        %v1048 = vunpack.c.l.b16 %v1012
        %v1049 = vunpack.c.l.b16 %v1013
        %v1050 = vunpack.c.l.b16 %v1014
        %v1051 = vpack.c.b16 %v1036, %v1035
        %v1052 = vpack.c.b16 %v1038, %v1037
        %v1053 = vpack.c.b16 %v1040, %v1039
        %v1054 = vpack.c.b16 %v1042, %v1041
        %v1055 = vpack.c.b16 %v1044, %v1043
        %v1056 = vpack.c.b16 %v1046, %v1045
        %v1057 = vpack.c.b16 %v1048, %v1047
        %v1058 = vpack.c.b16 %v1050, %v1049
        %1067 = vmatpush.bf16.msra.mxu0 %v1058
        %1068 = vmatpush.bf16.msra.mxu0 %v1057
        %1069 = vmatpush.bf16.msra.mxu0 %v1056
        %1070 = vmatpush.bf16.msra.mxu0 %v1055
        %1071 = vmatpush.bf16.msra.mxu0 %v1054
        %1072 = vmatpush.bf16.msra.mxu0 %v1053
        %1073 = vmatpush.bf16.msra.mxu0 %v1052
        %1074 = vmatpush.bf16.msra.mxu0 %v1051
        %1075 = vmatmul.bf16.gmra.mxu0 %v991
        %v1076 = vpop.f32.mrf.mxu0
        %v1077 = vadd.f32 %v1017, %v1076
        %v1078 = vpop.f32.mrf.mxu0
        %v1079 = vadd.f32 %v1017, %v1078
        %1080 = vmatmul.bf16.gmra.mxu0 %v992
        %v1081 = vpop.f32.mrf.mxu0
        %v1082 = vadd.f32 %v1017, %v1081
        %v1083 = vpop.f32.mrf.mxu0
        %v1084 = vadd.f32 %v1017, %v1083
        %1085 = vmatmul.bf16.gmra.mxu0 %v993
        %v1086 = vpop.f32.mrf.mxu0
        %v1087 = vadd.f32 %v1017, %v1086
        %v1088 = vpop.f32.mrf.mxu0
        %v1089 = vadd.f32 %v1017, %v1088
        %1090 = vmatmul.bf16.gmra.mxu0 %v994
        %v1091 = vpop.f32.mrf.mxu0
        %v1092 = vadd.f32 %v1017, %v1091
        %v1093 = vpop.f32.mrf.mxu0
        %v1094 = vadd.f32 %v1017, %v1093
        %1095 = vmatmul.bf16.gmra.mxu0 %v995
        %v1096 = vpop.f32.mrf.mxu0
        %v1097 = vadd.f32 %v1017, %v1096
        %v1098 = vpop.f32.mrf.mxu0
        %v1099 = vadd.f32 %v1017, %v1098
        %1100 = vmatmul.bf16.gmra.mxu0 %v996
        %v1101 = vpop.f32.mrf.mxu0
        %v1102 = vadd.f32 %v1017, %v1101
        %v1103 = vpop.f32.mrf.mxu0
        %v1104 = vadd.f32 %v1017, %v1103
        %1105 = vmatmul.bf16.gmra.mxu0 %v997
        %v1106 = vpop.f32.mrf.mxu0
        %v1107 = vadd.f32 %v1017, %v1106
        %v1108 = vpop.f32.mrf.mxu0
        %v1109 = vadd.f32 %v1017, %v1108
        %1110 = vmatmul.bf16.gmra.mxu0 %v998
        %v1111 = vpop.f32.mrf.mxu0
        %v1112 = vadd.f32 %v1017, %v1111
        %v1113 = vpop.f32.mrf.mxu0
        %v1114 = vadd.f32 %v1017, %v1113
        %1115 = vdwg.mxu0
        %v1116 = vpack.c.bf16 %v1079, %v1077
        %v1117 = vpack.c.bf16 %v1084, %v1082
        %v1118 = vpack.c.bf16 %v1089, %v1087
        %v1119 = vpack.c.bf16 %v1094, %v1092
        %v1120 = vpack.c.bf16 %v1099, %v1097
        %v1121 = vpack.c.bf16 %v1104, %v1102
        %v1122 = vpack.c.bf16 %v1109, %v1107
        %v1123 = vpack.c.bf16 %v1114, %v1112
        %v1124 = vld [vmem:[%s9] sm:$0xf]
        %v1125 = vld [vmem:[%s9 + $0x4] sm:$0xf]
        %v1126 = vld [vmem:[%s9 + $0x8] sm:$0xf]
        %v1127 = vld [vmem:[%s9 + $0xc] sm:$0xf]
        %v1128 = vld [vmem:[%s9 + $0x10] sm:$0xf]
        %v1129 = vld [vmem:[%s9 + $0x14] sm:$0xf]
        %v1130 = vld [vmem:[%s9 + $0x18] sm:$0xf]
        %v1131 = vld [vmem:[%s9 + $0x1c] sm:$0xf]
        %v1132 = vld [vmem:[%s9 + $0x20] sm:$0xf]
        %v1133 = vld [vmem:[%s9 + $0x24] sm:$0xf]
        %v1134 = vld [vmem:[%s9 + $0x28] sm:$0xf]
        %v1135 = vld [vmem:[%s9 + $0x2c] sm:$0xf]
        %v1136 = vld [vmem:[%s9 + $0x30] sm:$0xf]
        %v1137 = vld [vmem:[%s9 + $0x34] sm:$0xf]
        %v1138 = vld [vmem:[%s9 + $0x38] sm:$0xf]
        %v1139 = vld [vmem:[%s9 + $0x3c] sm:$0xf]
        %v1140 = vld [vmem:[%s10] sm:$0x1]
        %v1142 = vperm.slane %v1140, 0
        %v1160 = vunpack.c.l.b16 %v1124
        %v1161 = vunpack.c.l.b16 %v1125
        %v1162 = vunpack.c.l.b16 %v1126
        %v1163 = vunpack.c.l.b16 %v1127
        %v1164 = vunpack.c.l.b16 %v1128
        %v1165 = vunpack.c.l.b16 %v1129
        %v1166 = vunpack.c.l.b16 %v1130
        %v1167 = vunpack.c.l.b16 %v1131
        %v1168 = vunpack.c.l.b16 %v1132
        %v1169 = vunpack.c.l.b16 %v1133
        %v1170 = vunpack.c.l.b16 %v1134
        %v1171 = vunpack.c.l.b16 %v1135
        %v1172 = vunpack.c.l.b16 %v1136
        %v1173 = vunpack.c.l.b16 %v1137
        %v1174 = vunpack.c.l.b16 %v1138
        %v1175 = vunpack.c.l.b16 %v1139
        %v1176 = vpack.c.b16 %v1161, %v1160
        %v1177 = vpack.c.b16 %v1163, %v1162
        %v1178 = vpack.c.b16 %v1165, %v1164
        %v1179 = vpack.c.b16 %v1167, %v1166
        %v1180 = vpack.c.b16 %v1169, %v1168
        %v1181 = vpack.c.b16 %v1171, %v1170
        %v1182 = vpack.c.b16 %v1173, %v1172
        %v1183 = vpack.c.b16 %v1175, %v1174
        %1192 = vmatpush.bf16.msra.mxu0 %v1183
        %1193 = vmatpush.bf16.msra.mxu0 %v1182
        %1194 = vmatpush.bf16.msra.mxu0 %v1181
        %1195 = vmatpush.bf16.msra.mxu0 %v1180
        %1196 = vmatpush.bf16.msra.mxu0 %v1179
        %1197 = vmatpush.bf16.msra.mxu0 %v1178
        %1198 = vmatpush.bf16.msra.mxu0 %v1177
        %1199 = vmatpush.bf16.msra.mxu0 %v1176
        %1200 = vmatmul.bf16.gmra.mxu0 %v1116
        %v1201 = vpop.f32.mrf.mxu0
        %v1202 = vadd.f32 %v1142, %v1201
        %v1203 = vpop.f32.mrf.mxu0
        %v1204 = vadd.f32 %v1142, %v1203
        %1205 = vmatmul.bf16.gmra.mxu0 %v1117
        %v1206 = vpop.f32.mrf.mxu0
        %v1207 = vadd.f32 %v1142, %v1206
        %v1208 = vpop.f32.mrf.mxu0
        %v1209 = vadd.f32 %v1142, %v1208
        %1210 = vmatmul.bf16.gmra.mxu0 %v1118
        %v1211 = vpop.f32.mrf.mxu0
        %v1212 = vadd.f32 %v1142, %v1211
        %v1213 = vpop.f32.mrf.mxu0
        %v1214 = vadd.f32 %v1142, %v1213
        %1215 = vmatmul.bf16.gmra.mxu0 %v1119
        %v1216 = vpop.f32.mrf.mxu0
        %v1217 = vadd.f32 %v1142, %v1216
        %v1218 = vpop.f32.mrf.mxu0
        %v1219 = vadd.f32 %v1142, %v1218
        %1220 = vmatmul.bf16.gmra.mxu0 %v1120
        %v1221 = vpop.f32.mrf.mxu0
        %v1222 = vadd.f32 %v1142, %v1221
        %v1223 = vpop.f32.mrf.mxu0
        %v1224 = vadd.f32 %v1142, %v1223
        %1225 = vmatmul.bf16.gmra.mxu0 %v1121
        %v1226 = vpop.f32.mrf.mxu0
        %v1227 = vadd.f32 %v1142, %v1226
        %v1228 = vpop.f32.mrf.mxu0
        %v1229 = vadd.f32 %v1142, %v1228
        %1230 = vmatmul.bf16.gmra.mxu0 %v1122
        %v1231 = vpop.f32.mrf.mxu0
        %v1232 = vadd.f32 %v1142, %v1231
        %v1233 = vpop.f32.mrf.mxu0
        %v1234 = vadd.f32 %v1142, %v1233
        %1235 = vmatmul.bf16.gmra.mxu0 %v1123
        %v1236 = vpop.f32.mrf.mxu0
        %v1237 = vadd.f32 %v1142, %v1236
        %v1238 = vpop.f32.mrf.mxu0
        %v1239 = vadd.f32 %v1142, %v1238
        %1240 = vdwg.mxu0
        %v1241 = vmax.f32 %v1202, 0.0
        %v1242 = vmax.f32 %v1204, 0.0
        %v1243 = vmax.f32 %v1207, 0.0
        %v1244 = vmax.f32 %v1209, 0.0
        %v1245 = vmax.f32 %v1212, 0.0
        %v1246 = vmax.f32 %v1214, 0.0
        %v1247 = vmax.f32 %v1217, 0.0
        %v1248 = vmax.f32 %v1219, 0.0
        %v1249 = vmax.f32 %v1222, 0.0
        %v1250 = vmax.f32 %v1224, 0.0
        %v1251 = vmax.f32 %v1227, 0.0
        %v1252 = vmax.f32 %v1229, 0.0
        %v1253 = vmax.f32 %v1232, 0.0
        %v1254 = vmax.f32 %v1234, 0.0
        %v1255 = vmax.f32 %v1237, 0.0
        %v1256 = vmax.f32 %v1239, 0.0
        %v1257 = vpack.c.bf16 %v1242, %v1241
        %v1258 = vpack.c.bf16 %v1244, %v1243
        %v1259 = vpack.c.bf16 %v1246, %v1245
        %v1260 = vpack.c.bf16 %v1248, %v1247
        %v1261 = vpack.c.bf16 %v1250, %v1249
        %v1262 = vpack.c.bf16 %v1252, %v1251
        %v1263 = vpack.c.bf16 %v1254, %v1253
        %v1264 = vpack.c.bf16 %v1256, %v1255
        %v1265 = vld [vmem:[%s11] sm:$0xf]
        %v1266 = vld [vmem:[%s11 + $0x4] sm:$0xf]
        %v1267 = vld [vmem:[%s11 + $0x8] sm:$0xf]
        %v1268 = vld [vmem:[%s11 + $0xc] sm:$0xf]
        %v1269 = vld [vmem:[%s11 + $0x10] sm:$0xf]
        %v1270 = vld [vmem:[%s11 + $0x14] sm:$0xf]
        %v1271 = vld [vmem:[%s11 + $0x18] sm:$0xf]
        %v1272 = vld [vmem:[%s11 + $0x1c] sm:$0xf]
        %v1273 = vld [vmem:[%s11 + $0x20] sm:$0xf]
        %v1274 = vld [vmem:[%s11 + $0x24] sm:$0xf]
        %v1275 = vld [vmem:[%s11 + $0x28] sm:$0xf]
        %v1276 = vld [vmem:[%s11 + $0x2c] sm:$0xf]
        %v1277 = vld [vmem:[%s11 + $0x30] sm:$0xf]
        %v1278 = vld [vmem:[%s11 + $0x34] sm:$0xf]
        %v1279 = vld [vmem:[%s11 + $0x38] sm:$0xf]
        %v1280 = vld [vmem:[%s11 + $0x3c] sm:$0xf]
        %v1281 = vld [vmem:[%s12] sm:$0x1]
        %v1283 = vperm.slane %v1281, 0
        %v1301 = vunpack.c.l.b16 %v1265
        %v1302 = vunpack.c.l.b16 %v1266
        %v1303 = vunpack.c.l.b16 %v1267
        %v1304 = vunpack.c.l.b16 %v1268
        %v1305 = vunpack.c.l.b16 %v1269
        %v1306 = vunpack.c.l.b16 %v1270
        %v1307 = vunpack.c.l.b16 %v1271
        %v1308 = vunpack.c.l.b16 %v1272
        %v1309 = vunpack.c.l.b16 %v1273
        %v1310 = vunpack.c.l.b16 %v1274
        %v1311 = vunpack.c.l.b16 %v1275
        %v1312 = vunpack.c.l.b16 %v1276
        %v1313 = vunpack.c.l.b16 %v1277
        %v1314 = vunpack.c.l.b16 %v1278
        %v1315 = vunpack.c.l.b16 %v1279
        %v1316 = vunpack.c.l.b16 %v1280
        %v1317 = vpack.c.b16 %v1302, %v1301
        %v1318 = vpack.c.b16 %v1304, %v1303
        %v1319 = vpack.c.b16 %v1306, %v1305
        %v1320 = vpack.c.b16 %v1308, %v1307
        %v1321 = vpack.c.b16 %v1310, %v1309
        %v1322 = vpack.c.b16 %v1312, %v1311
        %v1323 = vpack.c.b16 %v1314, %v1313
        %v1324 = vpack.c.b16 %v1316, %v1315
        %1333 = vmatpush.bf16.msra.mxu0 %v1324
        %1334 = vmatpush.bf16.msra.mxu0 %v1323
        %1335 = vmatpush.bf16.msra.mxu0 %v1322
        %1336 = vmatpush.bf16.msra.mxu0 %v1321
        %1337 = vmatpush.bf16.msra.mxu0 %v1320
        %1338 = vmatpush.bf16.msra.mxu0 %v1319
        %1339 = vmatpush.bf16.msra.mxu0 %v1318
        %1340 = vmatpush.bf16.msra.mxu0 %v1317
        %1341 = vmatmul.bf16.gmra.mxu0 %v1257
        %v1342 = vpop.f32.mrf.mxu0
        %v1343 = vadd.f32 %v1283, %v1342
        %v1344 = vpop.f32.mrf.mxu0
        %v1345 = vadd.f32 %v1283, %v1344
        %1346 = vmatmul.bf16.gmra.mxu0 %v1258
        %v1347 = vpop.f32.mrf.mxu0
        %v1348 = vadd.f32 %v1283, %v1347
        %v1349 = vpop.f32.mrf.mxu0
        %v1350 = vadd.f32 %v1283, %v1349
        %1351 = vmatmul.bf16.gmra.mxu0 %v1259
        %v1352 = vpop.f32.mrf.mxu0
        %v1353 = vadd.f32 %v1283, %v1352
        %v1354 = vpop.f32.mrf.mxu0
        %v1355 = vadd.f32 %v1283, %v1354
        %1356 = vmatmul.bf16.gmra.mxu0 %v1260
        %v1357 = vpop.f32.mrf.mxu0
        %v1358 = vadd.f32 %v1283, %v1357
        %v1359 = vpop.f32.mrf.mxu0
        %v1360 = vadd.f32 %v1283, %v1359
        %1361 = vmatmul.bf16.gmra.mxu0 %v1261
        %v1362 = vpop.f32.mrf.mxu0
        %v1363 = vadd.f32 %v1283, %v1362
        %v1364 = vpop.f32.mrf.mxu0
        %v1365 = vadd.f32 %v1283, %v1364
        %1366 = vmatmul.bf16.gmra.mxu0 %v1262
        %v1367 = vpop.f32.mrf.mxu0
        %v1368 = vadd.f32 %v1283, %v1367
        %v1369 = vpop.f32.mrf.mxu0
        %v1370 = vadd.f32 %v1283, %v1369
        %1371 = vmatmul.bf16.gmra.mxu0 %v1263
        %v1372 = vpop.f32.mrf.mxu0
        %v1373 = vadd.f32 %v1283, %v1372
        %v1374 = vpop.f32.mrf.mxu0
        %v1375 = vadd.f32 %v1283, %v1374
        %1376 = vmatmul.bf16.gmra.mxu0 %v1264
        %v1377 = vpop.f32.mrf.mxu0
        %v1378 = vadd.f32 %v1283, %v1377
        %v1379 = vpop.f32.mrf.mxu0
        %v1380 = vadd.f32 %v1283, %v1379
        %1381 = vdwg.mxu0
        %v1382 = vmax.f32 %v1343, 0.0
        %v1383 = vmax.f32 %v1345, 0.0
        %v1384 = vmax.f32 %v1348, 0.0
        %v1385 = vmax.f32 %v1350, 0.0
        %v1386 = vmax.f32 %v1353, 0.0
        %v1387 = vmax.f32 %v1355, 0.0
        %v1388 = vmax.f32 %v1358, 0.0
        %v1389 = vmax.f32 %v1360, 0.0
        %v1390 = vmax.f32 %v1363, 0.0
        %v1391 = vmax.f32 %v1365, 0.0
        %v1392 = vmax.f32 %v1368, 0.0
        %v1393 = vmax.f32 %v1370, 0.0
        %v1394 = vmax.f32 %v1373, 0.0
        %v1395 = vmax.f32 %v1375, 0.0
        %v1396 = vmax.f32 %v1378, 0.0
        %v1397 = vmax.f32 %v1380, 0.0
        %v1398 = vpack.c.bf16 %v1383, %v1382
        %v1399 = vpack.c.bf16 %v1385, %v1384
        %v1400 = vpack.c.bf16 %v1387, %v1386
        %v1401 = vpack.c.bf16 %v1389, %v1388
        %v1402 = vpack.c.bf16 %v1391, %v1390
        %v1403 = vpack.c.bf16 %v1393, %v1392
        %v1404 = vpack.c.bf16 %v1395, %v1394
        %v1405 = vpack.c.bf16 %v1397, %v1396
        %v1406 = vld [vmem:[%s13] sm:$0xf]
        %v1407 = vld [vmem:[%s13 + $0x4] sm:$0xf]
        %v1408 = vld [vmem:[%s13 + $0x8] sm:$0xf]
        %v1409 = vld [vmem:[%s13 + $0xc] sm:$0xf]
        %v1410 = vld [vmem:[%s13 + $0x10] sm:$0xf]
        %v1411 = vld [vmem:[%s13 + $0x14] sm:$0xf]
        %v1412 = vld [vmem:[%s13 + $0x18] sm:$0xf]
        %v1413 = vld [vmem:[%s13 + $0x1c] sm:$0xf]
        %v1414 = vld [vmem:[%s14] sm:$0x1]
        %v1416 = vperm.slane %v1414, 0
        %v1426 = vunpack.c.l.b16 %v1406
        %v1427 = vunpack.c.l.b16 %v1407
        %v1428 = vunpack.c.l.b16 %v1408
        %v1429 = vunpack.c.l.b16 %v1409
        %v1430 = vunpack.c.l.b16 %v1410
        %v1431 = vunpack.c.l.b16 %v1411
        %v1432 = vunpack.c.l.b16 %v1412
        %v1433 = vunpack.c.l.b16 %v1413
        %v1434 = vpack.c.b16 %v1427, %v1426
        %v1435 = vpack.c.b16 %v1429, %v1428
        %v1436 = vpack.c.b16 %v1431, %v1430
        %v1437 = vpack.c.b16 %v1433, %v1432
        %v1443 = vsel %vm768, %v1398, 0
        %v1446 = vsel %vm768, %v1399, 0
        %v1449 = vsel %vm768, %v1400, 0
        %v1452 = vsel %vm768, %v1401, 0
        %v1455 = vsel %vm768, %v1402, 0
        %v1458 = vsel %vm768, %v1403, 0
        %v1461 = vsel %vm768, %v1404, 0
        %v1464 = vsel %vm768, %v1405, 0
        %1466 = vmatpush.bf16.msra.mxu0 0
        %1467 = vmatpush.bf16.msra.mxu0 0
        %1468 = vmatpush.bf16.msra.mxu0 0
        %1469 = vmatpush.bf16.msra.mxu0 0
        %1470 = vmatpush.bf16.msra.mxu0 %v1437
        %1471 = vmatpush.bf16.msra.mxu0 %v1436
        %1472 = vmatpush.bf16.msra.mxu0 %v1435
        %1473 = vmatpush.bf16.msra.mxu0 %v1434
        %1474 = vmatmul.bf16.gmra.mxu0 %v1443
        %v1475 = vpop.f32.mrf.mxu0
        %v1476 = vadd.f32 %v1416, %v1475
        %v1477 = vpop.f32.mrf.mxu0
        %v1478 = vadd.f32 %v1416, %v1477
        %1479 = vmatmul.bf16.gmra.mxu0 %v1446
        %v1480 = vpop.f32.mrf.mxu0
        %v1481 = vadd.f32 %v1416, %v1480
        %v1482 = vpop.f32.mrf.mxu0
        %v1483 = vadd.f32 %v1416, %v1482
        %1484 = vmatmul.bf16.gmra.mxu0 %v1449
        %v1485 = vpop.f32.mrf.mxu0
        %v1486 = vadd.f32 %v1416, %v1485
        %v1487 = vpop.f32.mrf.mxu0
        %v1488 = vadd.f32 %v1416, %v1487
        %1489 = vmatmul.bf16.gmra.mxu0 %v1452
        %v1490 = vpop.f32.mrf.mxu0
        %v1491 = vadd.f32 %v1416, %v1490
        %v1492 = vpop.f32.mrf.mxu0
        %v1493 = vadd.f32 %v1416, %v1492
        %1494 = vmatmul.bf16.gmra.mxu0 %v1455
        %v1495 = vpop.f32.mrf.mxu0
        %v1496 = vadd.f32 %v1416, %v1495
        %v1497 = vpop.f32.mrf.mxu0
        %v1498 = vadd.f32 %v1416, %v1497
        %1499 = vmatmul.bf16.gmra.mxu0 %v1458
        %v1500 = vpop.f32.mrf.mxu0
        %v1501 = vadd.f32 %v1416, %v1500
        %v1502 = vpop.f32.mrf.mxu0
        %v1503 = vadd.f32 %v1416, %v1502
        %1504 = vmatmul.bf16.gmra.mxu0 %v1461
        %v1505 = vpop.f32.mrf.mxu0
        %v1506 = vadd.f32 %v1416, %v1505
        %v1507 = vpop.f32.mrf.mxu0
        %v1508 = vadd.f32 %v1416, %v1507
        %1509 = vmatmul.bf16.gmra.mxu0 %v1464
        %v1510 = vpop.f32.mrf.mxu0
        %v1511 = vadd.f32 %v1416, %v1510
        %v1512 = vpop.f32.mrf.mxu0
        %v1513 = vadd.f32 %v1416, %v1512
        %1514 = vdwg.mxu0
        %v1515 = vmax.f32 %v1476, 0.0
        %v1516 = vmax.f32 %v1478, 0.0
        %v1517 = vmax.f32 %v1481, 0.0
        %v1518 = vmax.f32 %v1483, 0.0
        %v1519 = vmax.f32 %v1486, 0.0
        %v1520 = vmax.f32 %v1488, 0.0
        %v1521 = vmax.f32 %v1491, 0.0
        %v1522 = vmax.f32 %v1493, 0.0
        %v1523 = vmax.f32 %v1496, 0.0
        %v1524 = vmax.f32 %v1498, 0.0
        %v1525 = vmax.f32 %v1501, 0.0
        %v1526 = vmax.f32 %v1503, 0.0
        %v1527 = vmax.f32 %v1506, 0.0
        %v1528 = vmax.f32 %v1508, 0.0
        %v1529 = vmax.f32 %v1511, 0.0
        %v1530 = vmax.f32 %v1513, 0.0
        %v1531 = vpack.c.bf16 %v1516, %v1515
        %v1532 = vpack.c.bf16 %v1518, %v1517
        %v1533 = vpack.c.bf16 %v1520, %v1519
        %v1534 = vpack.c.bf16 %v1522, %v1521
        %v1535 = vpack.c.bf16 %v1524, %v1523
        %v1536 = vpack.c.bf16 %v1526, %v1525
        %v1537 = vpack.c.bf16 %v1528, %v1527
        %v1538 = vpack.c.bf16 %v1530, %v1529
        %v1539 = vld [vmem:[%s15] sm:$0xf]
        %v1540 = vld [vmem:[%s15 + $0x4] sm:$0xf]
        %v1541 = vld [vmem:[%s15 + $0x8] sm:$0xf]
        %v1542 = vld [vmem:[%s15 + $0xc] sm:$0xf]
        %v1543 = vld [vmem:[%s15 + $0x10] sm:$0xf]
        %v1544 = vld [vmem:[%s15 + $0x14] sm:$0xf]
        %v1545 = vld [vmem:[%s15 + $0x18] sm:$0xf]
        %v1546 = vld [vmem:[%s15 + $0x1c] sm:$0xf]
        %v1547 = vld [vmem:[%s16] sm:$0x1]
        %v1549 = vperm.slane %v1547, 0
        %v1559 = vunpack.c.l.b16 %v1539
        %v1560 = vunpack.c.l.b16 %v1540
        %v1561 = vunpack.c.l.b16 %v1541
        %v1562 = vunpack.c.l.b16 %v1542
        %v1563 = vunpack.c.l.b16 %v1543
        %v1564 = vunpack.c.l.b16 %v1544
        %v1565 = vunpack.c.l.b16 %v1545
        %v1566 = vunpack.c.l.b16 %v1546
        %v1567 = vpack.c.b16 %v1560, %v1559
        %v1568 = vpack.c.b16 %v1562, %v1561
        %v1569 = vpack.c.b16 %v1564, %v1563
        %v1570 = vpack.c.b16 %v1566, %v1565
        %v1576 = vsel %vm768, %v1531, 0
        %v1579 = vsel %vm768, %v1532, 0
        %v1582 = vsel %vm768, %v1533, 0
        %v1585 = vsel %vm768, %v1534, 0
        %v1588 = vsel %vm768, %v1535, 0
        %v1591 = vsel %vm768, %v1536, 0
        %v1594 = vsel %vm768, %v1537, 0
        %v1597 = vsel %vm768, %v1538, 0
        %1599 = vmatpush.bf16.msra.mxu0 0
        %1600 = vmatpush.bf16.msra.mxu0 0
        %1601 = vmatpush.bf16.msra.mxu0 0
        %1602 = vmatpush.bf16.msra.mxu0 0
        %1603 = vmatpush.bf16.msra.mxu0 %v1570
        %1604 = vmatpush.bf16.msra.mxu0 %v1569
        %1605 = vmatpush.bf16.msra.mxu0 %v1568
        %1606 = vmatpush.bf16.msra.mxu0 %v1567
        %1607 = vmatmul.bf16.gmra.mxu0 %v1576
        %v1608 = vpop.f32.mrf.mxu0
        %v1609 = vadd.f32 %v1549, %v1608
        %v1610 = vpop.f32.mrf.mxu0
        %v1611 = vadd.f32 %v1549, %v1610
        %1612 = vmatmul.bf16.gmra.mxu0 %v1579
        %v1613 = vpop.f32.mrf.mxu0
        %v1614 = vadd.f32 %v1549, %v1613
        %v1615 = vpop.f32.mrf.mxu0
        %v1616 = vadd.f32 %v1549, %v1615
        %1617 = vmatmul.bf16.gmra.mxu0 %v1582
        %v1618 = vpop.f32.mrf.mxu0
        %v1619 = vadd.f32 %v1549, %v1618
        %v1620 = vpop.f32.mrf.mxu0
        %v1621 = vadd.f32 %v1549, %v1620
        %1622 = vmatmul.bf16.gmra.mxu0 %v1585
        %v1623 = vpop.f32.mrf.mxu0
        %v1624 = vadd.f32 %v1549, %v1623
        %v1625 = vpop.f32.mrf.mxu0
        %v1626 = vadd.f32 %v1549, %v1625
        %1627 = vmatmul.bf16.gmra.mxu0 %v1588
        %v1628 = vpop.f32.mrf.mxu0
        %v1629 = vadd.f32 %v1549, %v1628
        %v1630 = vpop.f32.mrf.mxu0
        %v1631 = vadd.f32 %v1549, %v1630
        %1632 = vmatmul.bf16.gmra.mxu0 %v1591
        %v1633 = vpop.f32.mrf.mxu0
        %v1634 = vadd.f32 %v1549, %v1633
        %v1635 = vpop.f32.mrf.mxu0
        %v1636 = vadd.f32 %v1549, %v1635
        %1637 = vmatmul.bf16.gmra.mxu0 %v1594
        %v1638 = vpop.f32.mrf.mxu0
        %v1639 = vadd.f32 %v1549, %v1638
        %v1640 = vpop.f32.mrf.mxu0
        %v1641 = vadd.f32 %v1549, %v1640
        %1642 = vmatmul.bf16.gmra.mxu0 %v1597
        %v1643 = vpop.f32.mrf.mxu0
        %v1644 = vadd.f32 %v1549, %v1643
        %v1645 = vpop.f32.mrf.mxu0
        %v1646 = vadd.f32 %v1549, %v1645
        %1647 = vdwg.mxu0
        %1648 = vst [vmem:[%s580] sm:$0xff] %v1077
        %1649 = vst [vmem:[%s580 + $0x8] sm:$0xff] %v1079
        %1650 = vst [vmem:[%s580 + $0x10] sm:$0xff] %v1082
        %1651 = vst [vmem:[%s580 + $0x18] sm:$0xff] %v1084
        %1652 = vst [vmem:[%s580 + $0x20] sm:$0xff] %v1087
        %1653 = vst [vmem:[%s580 + $0x28] sm:$0xff] %v1089
        %1654 = vst [vmem:[%s580 + $0x30] sm:$0xff] %v1092
        %1655 = vst [vmem:[%s580 + $0x38] sm:$0xff] %v1094
        %1656 = vst [vmem:[%s580 + $0x40] sm:$0xff] %v1097
        %1657 = vst [vmem:[%s580 + $0x48] sm:$0xff] %v1099
        %1658 = vst [vmem:[%s580 + $0x50] sm:$0xff] %v1102
        %1659 = vst [vmem:[%s580 + $0x58] sm:$0xff] %v1104
        %1660 = vst [vmem:[%s580 + $0x60] sm:$0xff] %v1107
        %1661 = vst [vmem:[%s580 + $0x68] sm:$0xff] %v1109
        %1662 = vst [vmem:[%s580 + $0x70] sm:$0xff] %v1112
        %1663 = vst [vmem:[%s580 + $0x78] sm:$0xff] %v1114
        %1664 = vst [vmem:[%s573] sm:$0xff] %v1609
        %1665 = vst [vmem:[%s573 + $0x8] sm:$0xff] %v1611
        %1666 = vst [vmem:[%s573 + $0x10] sm:$0xff] %v1614
        %1667 = vst [vmem:[%s573 + $0x18] sm:$0xff] %v1616
        %1668 = vst [vmem:[%s573 + $0x20] sm:$0xff] %v1619
        %1669 = vst [vmem:[%s573 + $0x28] sm:$0xff] %v1621
        %1670 = vst [vmem:[%s573 + $0x30] sm:$0xff] %v1624
        %1671 = vst [vmem:[%s573 + $0x38] sm:$0xff] %v1626
        %1672 = vst [vmem:[%s573 + $0x40] sm:$0xff] %v1629
        %1673 = vst [vmem:[%s573 + $0x48] sm:$0xff] %v1631
        %1674 = vst [vmem:[%s573 + $0x50] sm:$0xff] %v1634
        %1675 = vst [vmem:[%s573 + $0x58] sm:$0xff] %v1636
        %1676 = vst [vmem:[%s573 + $0x60] sm:$0xff] %v1639
        %1677 = vst [vmem:[%s573 + $0x68] sm:$0xff] %v1641
        %1678 = vst [vmem:[%s573 + $0x70] sm:$0xff] %v1644
        %1679 = vst [vmem:[%s573 + $0x78] sm:$0xff] %v1646
        %s1680 = sand.u32 %s406, 1
        %s1681 = scalar_lea.sflag [#allocation3], %s1680
        %s1682 = sand.u32 %s406, 1
        %s1683 = smul.addr %s1682, 128
        %s1684 = scalar_lea.vmem [#allocation2], %s1683
        %s1685 = sand.u32 %s432, 1
        %s1686 = scalar_lea.sflag [#allocation5], %s1685
        %s1687 = sand.u32 %s432, 1
        %s1688 = smul.addr %s1687, 128
        %s1689 = scalar_lea.vmem [#allocation4], %s1688
        // Predicated region
        $region89: #{tpu_custom_call.1} parent=87 // pred_check
          %p1690 = pneg %p416
        $region90: #{tpu_custom_call.1} parent=87 // pred_check_branch
          %1692 = sbr.rel (%p1690) target = $region92
        $region91: #{tpu_custom_call.1} parent=87 // pred_region
          %s1693 = smul.u32 16, %s36
          %1695 = vsyncadd %s1681, 0
          %s1696 = smul.addr %s1693, 8
          %s1697 = scalar_lea.hbm %s17, %s1696
          %s1698 = sshll.u32 %s1684, 4
          %s1699 = int_to_ptr.vmem [resolvable:$true] %s1698
          %s1700 = sshll.u32 %s1697, 4
          %s1701 = int_to_ptr.hbm [resolvable:$true] %s1700
          %1706 = dma.vmem_to_hbm [thread:$0]  %s1699, 2048, %s1701, %s1681, 128, 128, 8
        $region92: #{tpu_custom_call.1} parent=87 // pred_fallthru
          _
        // Predicated region
        $region93: #{tpu_custom_call.1} parent=87 // pred_check
          %p1707 = pneg %p442
        $region94: #{tpu_custom_call.1} parent=87 // pred_check_branch
          %1709 = sbr.rel (%p1707) target = $region96
        $region95: #{tpu_custom_call.1} parent=87 // pred_region
          %s1710 = smul.u32 16, %s36
          %1712 = vsyncadd %s1686, 0
          %s1713 = smul.addr %s1710, 8
          %s1714 = scalar_lea.hbm %s18, %s1713
          %s1715 = sshll.u32 %s1689, 4
          %s1716 = int_to_ptr.vmem [resolvable:$true] %s1715
          %s1717 = sshll.u32 %s1714, 4
          %s1718 = int_to_ptr.hbm [resolvable:$true] %s1717
          %1723 = dma.vmem_to_hbm [thread:$0]  %s1716, 2048, %s1718, %s1686, 128, 128, 8
        $region96: #{tpu_custom_call.1} parent=87 // pred_fallthru
          _
      $region88: #{tpu_custom_call.1} parent=5 // pred_fallthru
        _
      %p1724 = scmp.le.s32.totalorder 2, %s31
      // Predicated region
      $region97: #{tpu_custom_call.1} parent=5 // pred_check
        %p1725 = pneg %p1724
      $region98: #{tpu_custom_call.1} parent=5 // pred_check_branch
        %1727 = sbr.rel (%p1725) target = $region100
      $region99: #{tpu_custom_call.1} parent=5 // pred_region
        %s1728 = ssub.s32 %s31, 2
        // Predicated region
        $region101: #{tpu_custom_call.1} parent=99 // pred_check
          %p1729 = pneg %p422
        $region102: #{tpu_custom_call.1} parent=99 // pred_check_branch
          %1731 = sbr.rel (%p1729) target = $region104
        $region103: #{tpu_custom_call.1} parent=99 // pred_region
          %s1732 = sand.u32 %s407, 1
          %s1733 = scalar_lea.sflag [#allocation3], %s1732
          %s1734 = sand.u32 %s407, 1
          %s1735 = smul.addr %s1734, 128
          %s1736 = scalar_lea.vmem [#allocation2], %s1735
          %1738 = dma.done %s1733, 2048
        $region104: #{tpu_custom_call.1} parent=99 // pred_fallthru
          _
        // Predicated region
        $region105: #{tpu_custom_call.1} parent=99 // pred_check
          %p1739 = pneg %p448
        $region106: #{tpu_custom_call.1} parent=99 // pred_check_branch
          %1741 = sbr.rel (%p1739) target = $region108
        $region107: #{tpu_custom_call.1} parent=99 // pred_region
          %s1742 = sand.u32 %s433, 1
          %s1743 = scalar_lea.sflag [#allocation5], %s1742
          %s1744 = sand.u32 %s433, 1
          %s1745 = smul.addr %s1744, 128
          %s1746 = scalar_lea.vmem [#allocation4], %s1745
          %1748 = dma.done %s1743, 2048
        $region108: #{tpu_custom_call.1} parent=99 // pred_fallthru
          _
      $region100: #{tpu_custom_call.1} parent=5 // pred_fallthru
        _
    $region6: #{tpu_custom_call.1} parent=1 // loop_footer
      %s35 = sadd.s32 1, %s31
    $region7: #{tpu_custom_call.1} parent=1 // loop_footer_branch
      %30 = sbr.rel target = $region3
    $region8: #{tpu_custom_call.1} parent=1 // loop_exit
      _
    %1749 = vsyncpa [#allocation3], 1
    %s1750 = scalar_lea.sflag [#allocation3], 1
    %1751 = vsyncpa %s1750, 1
    %1752 = vsyncpa [#allocation5], 1
    %s1753 = scalar_lea.sflag [#allocation5], 1
    %1754 = vsyncpa %s1753, 1

</llo_original>
